<compile_context>
chip_gen: v7x
topology: tpu7x:2x2x1
jax: 0.10.0
libtpu: 0.0.40
codegen_flags: <defaults>
</compile_context>

<pallas_src>
import jax
import jax.numpy as jnp
from jax.experimental import pallas as pl
from jax.experimental.pallas import tpu as pltpu


def _gat_kernel(q_ref, k_ref, v_ref, adj_ref, s_ref,
                wq_ref, wk_ref, b_ref, wrc_ref,
                attn_w_ref, attn_sum_ref):
    # q_ref:   (TB, 1, H)   queries for this batch tile
    # k_ref:   (TB, N, H)
    # v_ref:   (TB, N, H)
    # adj_ref: (TB, 1, N)
    # s_ref:   (TB, N, 1)
    # wq_ref:  (1, 1, H)    first half of nn.Linear(2H, 1) weight (applied to Q)
    # wk_ref:  (1, 1, H)    second half (applied to K)
    # b_ref:   (1, 1)       bias of nn.Linear(2H, 1)
    # wrc_ref: (1, H, 2H)   [Wr0.weight.T | Wr1.weight.T] fused
    TB, N, H = k_ref.shape

    q = q_ref[...]
    k = k_ref[...]
    v = v_ref[...]
    adj = adj_ref[...]
    s = s_ref[...]

    # alpha[b, 0, n] = wq . Q[b] + wk . K[b, n] + bias
    score_q = jnp.sum(q * wq_ref[...], axis=-1, keepdims=True)            # (TB,1,1)
    wk_b = jnp.broadcast_to(wk_ref[...], (TB, 1, H))
    score_k = jnp.einsum("bqd,bkd->bqk", wk_b, k,
                         preferred_element_type=jnp.float32)              # (TB,1,N)
    alpha = score_k + score_q + b_ref[0, 0]

    # mask_logic: alpha - (1 - adj) * 1e30  (kept in f32 so 1e30 stays finite)
    alpha = alpha - (1.0 - adj) * 1e30

    # softmax over N (lane axis)
    m = jnp.max(alpha, axis=-1, keepdims=True)
    e = jnp.exp(alpha - m)
    attn = e / jnp.sum(e, axis=-1, keepdims=True)                          # (TB,1,N)
    attn_w_ref[...] = attn

    # fused gated value projection: a single (N,H) @ (H,2H) MXU pass per row,
    # then gate the two halves with s_mask.
    wrc = jnp.broadcast_to(wrc_ref[...], (TB, H, 2 * H))
    vproj = jnp.einsum("bnh,bhk->bnk", v, wrc,
                       preferred_element_type=jnp.float32)                 # (TB,N,2H)
    vmix = vproj[..., :H] * s + vproj[..., H:] * (1.0 - s)                 # (TB,N,H)

    # attn_sum = Q - attn @ Vmix
    ctx = jnp.einsum("bqn,bnh->bqh", attn, vmix,
                     preferred_element_type=jnp.float32)                   # (TB,1,H)
    attn_sum_ref[...] = q - ctx


def gat_encoder_pallas(Q, K, V, adj, s_mask, params, *, block_b=8):
    """Returns (attn_weight (B,1,N), attn_sum (B,H)) like GAT_encoder.forward."""
    B, N, H = K.shape
    f32 = jnp.float32

    TB = int(block_b)
    Bp = ((B + TB - 1) // TB) * TB
    pad = Bp - B

    q3 = Q.reshape(B, 1, H).astype(f32)
    k3 = K.astype(f32)
    v3 = V.astype(f32)
    adj3 = adj.reshape(B, 1, N).astype(f32)
    s3 = s_mask.reshape(B, N, 1).astype(f32)
    if pad:
        zpad = ((0, pad), (0, 0), (0, 0))
        q3 = jnp.pad(q3, zpad)
        k3 = jnp.pad(k3, zpad)
        v3 = jnp.pad(v3, zpad)
        # padded rows get adj == 1 so the masked softmax has no all-masked
        # (0/0) rows; their outputs are discarded below.
        adj3 = jnp.pad(adj3, zpad, constant_values=1.0)
        s3 = jnp.pad(s3, zpad)

    w_att = params["w_att"].astype(f32)                       # (1, 2H)
    wq = w_att[:, :H].reshape(1, 1, H)
    wk = w_att[:, H:].reshape(1, 1, H)
    b_att = params["b_att"].reshape(1, 1).astype(f32)
    wrc = jnp.concatenate([params["Wr0"].T, params["Wr1"].T],
                          axis=1).astype(f32).reshape(1, H, 2 * H)

    grid = (Bp // TB,)
    grid_spec = pltpu.PrefetchScalarGridSpec(
        num_scalar_prefetch=0,
        grid=grid,
        in_specs=[
            pl.BlockSpec((TB, 1, H), lambda b: (b, 0, 0)),        # Q
            pl.BlockSpec((TB, N, H), lambda b: (b, 0, 0)),        # K
            pl.BlockSpec((TB, N, H), lambda b: (b, 0, 0)),        # V
            pl.BlockSpec((TB, 1, N), lambda b: (b, 0, 0)),        # adj
            pl.BlockSpec((TB, N, 1), lambda b: (b, 0, 0)),        # s_mask
            pl.BlockSpec((1, 1, H), lambda b: (0, 0, 0)),         # wq (invariant)
            pl.BlockSpec((1, 1, H), lambda b: (0, 0, 0)),         # wk (invariant)
            pl.BlockSpec((1, 1), lambda b: (0, 0)),               # bias
            pl.BlockSpec((1, H, 2 * H), lambda b: (0, 0, 0)),     # [Wr0^T|Wr1^T]
        ],
        out_specs=[
            pl.BlockSpec((TB, 1, N), lambda b: (b, 0, 0)),        # attn_weight
            pl.BlockSpec((TB, 1, H), lambda b: (b, 0, 0)),        # attn_sum
        ],
    )

    flops = (2 * Bp * N * H * (2 * H)     # fused Wr projection
             + 2 * Bp * N * H             # wk . K logits
             + 2 * Bp * N * H)            # attn @ Vmix
    bytes_accessed = 4 * (Bp * H + 2 * Bp * N * H + 2 * Bp * N
                          + Bp * N + Bp * H + 2 * H * H + 2 * H + 1)
    cost = pl.CostEstimate(flops=flops, transcendentals=Bp * N,
                           bytes_accessed=bytes_accessed)

    attn_w, attn_sum = pl.pallas_call(
        _gat_kernel,
        out_shape=(
            jax.ShapeDtypeStruct((Bp, 1, N), f32),
            jax.ShapeDtypeStruct((Bp, 1, H), f32),
        ),
        grid_spec=grid_spec,
        compiler_params=pltpu.CompilerParams(
            dimension_semantics=("parallel",)),
        cost_estimate=cost,
    )(q3, k3, v3, adj3, s3, wq, wk, b_att, wrc)

    return attn_w[:B], attn_sum[:B, 0, :]


def gat_encoder_ref(Q, K, V, adj, s_mask, params):
    """Pure-JAX reference matching the PyTorch forward exactly."""
    B, N, H = K.shape
    Qe = jnp.broadcast_to(Q[:, None, :], (B, N, H))
    X = jnp.concatenate([Qe, K], axis=2)                         # (B, N, 2H)
    alpha = (X @ params["w_att"].T + params["b_att"])            # (B, N, 1)
    alpha = jnp.transpose(alpha, (0, 2, 1))                      # (B, 1, N)
    adj1 = adj[:, None, :]
    alpha = alpha - (1.0 - adj1) * 1e30
    attn = jax.nn.softmax(alpha, axis=2)                         # (B, 1, N)
    V0 = V @ params["Wr0"].T
    V1 = V @ params["Wr1"].T
    s = s_mask[:, :, None].astype(jnp.float32)
    Vm = V0 * s + V1 * (1.0 - s)
    attn_sum = Q[:, None, :] - jnp.einsum("bqn,bnh->bqh", attn, Vm)
    return attn, attn_sum[:, 0, :]


def _init_params(key, hidden_size):
    """Deterministic synthetic parameters (shapes from GAT_encoder.__init__)."""
    k1, k2, k3, k4 = jax.random.split(key, 4)
    bound_lin = 1.0 / jnp.sqrt(2.0 * hidden_size)
    bound_wr = 1.0 / jnp.sqrt(float(hidden_size))
    return {
        # nn.Linear(hidden_size * 2, 1)
        "w_att": jax.random.uniform(k1, (1, 2 * hidden_size), jnp.float32,
                                    -bound_lin, bound_lin),
        "b_att": jax.random.uniform(k2, (1,), jnp.float32,
                                    -bound_lin, bound_lin),
        # nn.Linear(hidden_size, hidden_size, bias=False) x2
        "Wr0": jax.random.uniform(k3, (hidden_size, hidden_size), jnp.float32,
                                  -bound_wr, bound_wr),
        "Wr1": jax.random.uniform(k4, (hidden_size, hidden_size), jnp.float32,
                                  -bound_wr, bound_wr),
    }


if __name__ == "__main__":
    B, N, H = 2, 8, 32

    key = jax.random.PRNGKey(0)
    kq, kk, kv, ka, ks, kp = jax.random.split(key, 6)

    Q = jax.random.normal(kq, (B, H), jnp.float32)
    K = jax.random.normal(kk, (B, N, H), jnp.float32)
    V = jax.random.normal(kv, (B, N, H), jnp.float32)
    adj = (jax.random.uniform(ka, (B, N)) > 0.3).astype(jnp.float32)
    # make sure at least one node is adjacent per row (avoid all-masked softmax)
    adj = adj.at[:, 0].set(1.0)
    s_mask = (jax.random.uniform(ks, (B, N)) > 0.5).astype(jnp.float32)

    params = _init_params(kp, H)

    attn_w, attn_sum = gat_encoder_pallas(Q, K, V, adj, s_mask, params)
    jax.block_until_ready((attn_w, attn_sum))

    attn_w_ref, attn_sum_ref = gat_encoder_ref(Q, K, V, adj, s_mask, params)

    assert attn_w.shape == (B, 1, N)
    assert attn_sum.shape == (B, H)
    assert jnp.allclose(attn_w, attn_w_ref, atol=1e-5, rtol=1e-5)
    assert jnp.allclose(attn_sum, attn_sum_ref, atol=1e-5, rtol=1e-5)

    print("KERNEL_OK")
</pallas_src>

<mosaic_0001>
module attributes {stable_mosaic.version = 11 : i64} {
  func.func @_gat_kernel(%arg0: i32, %arg1: memref<8x1x32xf32, #tpu.memory_space<vmem>>, %arg2: memref<8x8x32xf32, #tpu.memory_space<vmem>>, %arg3: memref<8x8x32xf32, #tpu.memory_space<vmem>>, %arg4: memref<8x1x8xf32, #tpu.memory_space<vmem>>, %arg5: memref<8x8x1xf32, #tpu.memory_space<vmem>>, %arg6: memref<1x1x32xf32, #tpu.memory_space<vmem>>, %arg7: memref<1x1x32xf32, #tpu.memory_space<vmem>>, %arg8: memref<1x1xf32, #tpu.memory_space<vmem>>, %arg9: memref<1x32x64xf32, #tpu.memory_space<vmem>>, %arg10: memref<8x1x8xf32, #tpu.memory_space<vmem>>, %arg11: memref<8x1x32xf32, #tpu.memory_space<vmem>>) attributes {dimension_semantics = [#tpu.dimension_semantics<parallel>], iteration_bounds = array<i64: 1>, scalar_prefetch = 0 : i64, scratch_operands = 0 : i64, tpu.core_type = #tpu.core_type<tc>, window_params = [{transform_indices = @transform_0, window_bounds = array<i64: 8, 1, 32>}, {transform_indices = @transform_1, window_bounds = array<i64: 8, 8, 32>}, {transform_indices = @transform_2, window_bounds = array<i64: 8, 8, 32>}, {transform_indices = @transform_3, window_bounds = array<i64: 8, 1, 8>}, {transform_indices = @transform_4, window_bounds = array<i64: 8, 8, 1>}, {pipeline_mode = #tpu.pipeline_mode<synchronous>, transform_indices = @transform_5, window_bounds = array<i64: 1, 1, 32>}, {pipeline_mode = #tpu.pipeline_mode<synchronous>, transform_indices = @transform_6, window_bounds = array<i64: 1, 1, 32>}, {pipeline_mode = #tpu.pipeline_mode<synchronous>, transform_indices = @transform_7, window_bounds = array<i64: 1, 1>}, {pipeline_mode = #tpu.pipeline_mode<synchronous>, transform_indices = @transform_8, window_bounds = array<i64: 1, 32, 64>}, {transform_indices = @transform_9, window_bounds = array<i64: 8, 1, 8>}, {transform_indices = @transform_10, window_bounds = array<i64: 8, 1, 32>}]} {
    %c0 = arith.constant 0 : index
    %c0_0 = arith.constant 0 : index
    %c0_1 = arith.constant 0 : index
    %0 = vector.load %arg1[%c0, %c0_0, %c0_1] : memref<8x1x32xf32, #tpu.memory_space<vmem>>, vector<8x1x32xf32>
    %c0_2 = arith.constant 0 : index
    %c0_3 = arith.constant 0 : index
    %c0_4 = arith.constant 0 : index
    %1 = vector.load %arg2[%c0_2, %c0_3, %c0_4] : memref<8x8x32xf32, #tpu.memory_space<vmem>>, vector<8x8x32xf32>
    %c0_5 = arith.constant 0 : index
    %c0_6 = arith.constant 0 : index
    %c0_7 = arith.constant 0 : index
    %2 = vector.load %arg3[%c0_5, %c0_6, %c0_7] : memref<8x8x32xf32, #tpu.memory_space<vmem>>, vector<8x8x32xf32>
    %c0_8 = arith.constant 0 : index
    %c0_9 = arith.constant 0 : index
    %c0_10 = arith.constant 0 : index
    %3 = vector.load %arg4[%c0_8, %c0_9, %c0_10] : memref<8x1x8xf32, #tpu.memory_space<vmem>>, vector<8x1x8xf32>
    %c0_11 = arith.constant 0 : index
    %c0_12 = arith.constant 0 : index
    %c0_13 = arith.constant 0 : index
    %4 = vector.load %arg5[%c0_11, %c0_12, %c0_13] : memref<8x8x1xf32, #tpu.memory_space<vmem>>, vector<8x8x1xf32>
    %c0_14 = arith.constant 0 : index
    %c0_15 = arith.constant 0 : index
    %c0_16 = arith.constant 0 : index
    %5 = vector.load %arg6[%c0_14, %c0_15, %c0_16] : memref<1x1x32xf32, #tpu.memory_space<vmem>>, vector<1x1x32xf32>
    %6 = vector.broadcast %5 : vector<1x1x32xf32> to vector<8x1x32xf32>
    %7 = arith.mulf %0, %6 : vector<8x1x32xf32>
    %cst = arith.constant dense<0.000000e+00> : vector<8x1xf32>
    %8 = vector.multi_reduction <add>, %7, %cst [2] : vector<8x1x32xf32> to vector<8x1xf32>
    %9 = vector.shape_cast %8 : vector<8x1xf32> to vector<8x1x1xf32>
    %c0_17 = arith.constant 0 : index
    %c0_18 = arith.constant 0 : index
    %c0_19 = arith.constant 0 : index
    %10 = vector.load %arg7[%c0_17, %c0_18, %c0_19] : memref<1x1x32xf32, #tpu.memory_space<vmem>>, vector<1x1x32xf32>
    %11 = vector.shape_cast %10 : vector<1x1x32xf32> to vector<1x1x32xf32>
    %12 = vector.broadcast %11 : vector<1x1x32xf32> to vector<8x1x32xf32>
    "tpu.trace_start"() <{level = 10 : i32, message = "bqd,bkd->bqk"}> : () -> ()
    %cst_20 = arith.constant dense<0.000000e+00> : vector<8x1x8xf32>
    %13 = tpu.matmul %12, %1, %cst_20 {dimension_numbers = #tpu.dot_dimension_numbers<[2], [2], [1], [1], [0, 0, 0, 1, 1, 1], [0], [0]>} : vector<8x1x32xf32>, vector<8x8x32xf32>, vector<8x1x8xf32> -> vector<8x1x8xf32>
    "tpu.trace_stop"() : () -> ()
    %14 = vector.broadcast %9 : vector<8x1x1xf32> to vector<8x1x8xf32>
    %15 = arith.addf %13, %14 : vector<8x1x8xf32>
    %c0_21 = arith.constant 0 : index
    %c0_22 = arith.constant 0 : index
    %16 = vector.load %arg8[%c0_21, %c0_22] : memref<1x1xf32, #tpu.memory_space<vmem>>, vector<1x1xf32>
    %17 = vector.extract %16[0, 0] : f32 from vector<1x1xf32>
    %18 = vector.broadcast %17 : f32 to vector<8x1x8xf32>
    %19 = arith.addf %15, %18 : vector<8x1x8xf32>
    %cst_23 = arith.constant 1.000000e+00 : f32
    %20 = vector.broadcast %cst_23 : f32 to vector<8x1x8xf32>
    %21 = arith.subf %20, %3 : vector<8x1x8xf32>
    %cst_24 = arith.constant 1.000000e+30 : f32
    %22 = vector.broadcast %cst_24 : f32 to vector<8x1x8xf32>
    %23 = arith.mulf %21, %22 : vector<8x1x8xf32>
    %24 = arith.subf %19, %23 : vector<8x1x8xf32>
    %cst_25 = arith.constant dense<0xFF800000> : vector<8x1xf32>
    %25 = vector.multi_reduction <maximumf>, %24, %cst_25 [2] : vector<8x1x8xf32> to vector<8x1xf32>
    %26 = vector.shape_cast %25 : vector<8x1xf32> to vector<8x1x1xf32>
    %27 = vector.broadcast %26 : vector<8x1x1xf32> to vector<8x1x8xf32>
    %28 = arith.subf %24, %27 : vector<8x1x8xf32>
    %29 = math.exp %28 : vector<8x1x8xf32>
    %cst_26 = arith.constant dense<0.000000e+00> : vector<8x1xf32>
    %30 = vector.multi_reduction <add>, %29, %cst_26 [2] : vector<8x1x8xf32> to vector<8x1xf32>
    %31 = vector.shape_cast %30 : vector<8x1xf32> to vector<8x1x1xf32>
    %32 = vector.broadcast %31 : vector<8x1x1xf32> to vector<8x1x8xf32>
    %33 = arith.divf %29, %32 : vector<8x1x8xf32>
    %c0_27 = arith.constant 0 : index
    %c0_28 = arith.constant 0 : index
    %c0_29 = arith.constant 0 : index
    %34 = vector.load %arg10[%c0_27, %c0_28, %c0_29] : memref<8x1x8xf32, #tpu.memory_space<vmem>>, vector<8x1x8xf32>
    tpu.vector_store %arg10[%c0_27, %c0_28, %c0_29], %33 {strides = array<i32>} : memref<8x1x8xf32, #tpu.memory_space<vmem>>, vector<8x1x8xf32>,
    %c0_30 = arith.constant 0 : index
    %c0_31 = arith.constant 0 : index
    %c0_32 = arith.constant 0 : index
    %35 = vector.load %arg9[%c0_30, %c0_31, %c0_32] : memref<1x32x64xf32, #tpu.memory_space<vmem>>, vector<1x32x64xf32>
    %36 = vector.shape_cast %35 : vector<1x32x64xf32> to vector<1x32x64xf32>
    %37 = vector.broadcast %36 : vector<1x32x64xf32> to vector<8x32x64xf32>
    "tpu.trace_start"() <{level = 10 : i32, message = "bnh,bhk->bnk"}> : () -> ()
    %cst_33 = arith.constant dense<0.000000e+00> : vector<8x8x64xf32>
    %38 = tpu.matmul %2, %37, %cst_33 {dimension_numbers = #tpu.dot_dimension_numbers<[2], [1], [1], [2], [0, 0, 0, 1, 1, 2], [0], [0]>} : vector<8x8x32xf32>, vector<8x32x64xf32>, vector<8x8x64xf32> -> vector<8x8x64xf32>
    "tpu.trace_stop"() : () -> ()
    %39 = vector.extract_strided_slice %38 {offsets = [0, 0, 0], sizes = [8, 8, 32], strides = [1, 1, 1]} : vector<8x8x64xf32> to vector<8x8x32xf32>
    %40 = vector.broadcast %4 : vector<8x8x1xf32> to vector<8x8x32xf32>
    %41 = arith.mulf %39, %40 : vector<8x8x32xf32>
    %42 = vector.extract_strided_slice %38 {offsets = [0, 0, 32], sizes = [8, 8, 32], strides = [1, 1, 1]} : vector<8x8x64xf32> to vector<8x8x32xf32>
    %cst_34 = arith.constant 1.000000e+00 : f32
    %43 = vector.broadcast %cst_34 : f32 to vector<8x8x1xf32>
    %44 = arith.subf %43, %4 : vector<8x8x1xf32>
    %45 = vector.broadcast %44 : vector<8x8x1xf32> to vector<8x8x32xf32>
    %46 = arith.mulf %42, %45 : vector<8x8x32xf32>
    %47 = arith.addf %41, %46 : vector<8x8x32xf32>
    "tpu.trace_start"() <{level = 10 : i32, message = "bqn,bnh->bqh"}> : () -> ()
    %cst_35 = arith.constant dense<0.000000e+00> : vector<8x1x32xf32>
    %48 = tpu.matmul %33, %47, %cst_35 {dimension_numbers = #tpu.dot_dimension_numbers<[2], [1], [1], [2], [0, 0, 0, 1, 1, 2], [0], [0]>} : vector<8x1x8xf32>, vector<8x8x32xf32>, vector<8x1x32xf32> -> vector<8x1x32xf32>
    "tpu.trace_stop"() : () -> ()
    %49 = arith.subf %0, %48 : vector<8x1x32xf32>
    %c0_36 = arith.constant 0 : index
    %c0_37 = arith.constant 0 : index
    %c0_38 = arith.constant 0 : index
    %50 = vector.load %arg11[%c0_36, %c0_37, %c0_38] : memref<8x1x32xf32, #tpu.memory_space<vmem>>, vector<8x1x32xf32>
    tpu.vector_store %arg11[%c0_36, %c0_37, %c0_38], %49 {strides = array<i32>} : memref<8x1x32xf32, #tpu.memory_space<vmem>>, vector<8x1x32xf32>,
    return
  }
  func.func @transform_0(%arg0: i32) -> (i32, i32, i32) {
    %c0_i32 = arith.constant 0 : i32
    %c0_i32_0 = arith.constant 0 : i32
    %c0_i32_1 = arith.constant 0 : i32
    return %arg0, %c0_i32, %c0_i32_0 : i32, i32, i32
  }
  func.func @transform_1(%arg0: i32) -> (i32, i32, i32) {
    %c0_i32 = arith.constant 0 : i32
    %c0_i32_0 = arith.constant 0 : i32
    %c0_i32_1 = arith.constant 0 : i32
    return %arg0, %c0_i32, %c0_i32_0 : i32, i32, i32
  }
  func.func @transform_2(%arg0: i32) -> (i32, i32, i32) {
    %c0_i32 = arith.constant 0 : i32
    %c0_i32_0 = arith.constant 0 : i32
    %c0_i32_1 = arith.constant 0 : i32
    return %arg0, %c0_i32, %c0_i32_0 : i32, i32, i32
  }
  func.func @transform_3(%arg0: i32) -> (i32, i32, i32) {
    %c0_i32 = arith.constant 0 : i32
    %c0_i32_0 = arith.constant 0 : i32
    %c0_i32_1 = arith.constant 0 : i32
    return %arg0, %c0_i32, %c0_i32_0 : i32, i32, i32
  }
  func.func @transform_4(%arg0: i32) -> (i32, i32, i32) {
    %c0_i32 = arith.constant 0 : i32
    %c0_i32_0 = arith.constant 0 : i32
    %c0_i32_1 = arith.constant 0 : i32
    return %arg0, %c0_i32, %c0_i32_0 : i32, i32, i32
  }
  func.func @transform_5(%arg0: i32) -> (i32, i32, i32) {
    %c0_i32 = arith.constant 0 : i32
    %c0_i32_0 = arith.constant 0 : i32
    %c0_i32_1 = arith.constant 0 : i32
    %c0_i32_2 = arith.constant 0 : i32
    return %c0_i32, %c0_i32_0, %c0_i32_1 : i32, i32, i32
  }
  func.func @transform_6(%arg0: i32) -> (i32, i32, i32) {
    %c0_i32 = arith.constant 0 : i32
    %c0_i32_0 = arith.constant 0 : i32
    %c0_i32_1 = arith.constant 0 : i32
    %c0_i32_2 = arith.constant 0 : i32
    return %c0_i32, %c0_i32_0, %c0_i32_1 : i32, i32, i32
  }
  func.func @transform_7(%arg0: i32) -> (i32, i32) {
    %c0_i32 = arith.constant 0 : i32
    %c0_i32_0 = arith.constant 0 : i32
    %c0_i32_1 = arith.constant 0 : i32
    return %c0_i32, %c0_i32_0 : i32, i32
  }
  func.func @transform_8(%arg0: i32) -> (i32, i32, i32) {
    %c0_i32 = arith.constant 0 : i32
    %c0_i32_0 = arith.constant 0 : i32
    %c0_i32_1 = arith.constant 0 : i32
    %c0_i32_2 = arith.constant 0 : i32
    return %c0_i32, %c0_i32_0, %c0_i32_1 : i32, i32, i32
  }
  func.func @transform_9(%arg0: i32) -> (i32, i32, i32) {
    %c0_i32 = arith.constant 0 : i32
    %c0_i32_0 = arith.constant 0 : i32
    %c0_i32_1 = arith.constant 0 : i32
    return %arg0, %c0_i32, %c0_i32_0 : i32, i32, i32
  }
  func.func @transform_10(%arg0: i32) -> (i32, i32, i32) {
    %c0_i32 = arith.constant 0 : i32
    %c0_i32_0 = arith.constant 0 : i32
    %c0_i32_1 = arith.constant 0 : i32
    return %arg0, %c0_i32, %c0_i32_0 : i32, i32, i32
  }
}

</mosaic_0001>

<llo_original>
// kernel: tpu_custom_call.1
$region0: #{tpu_custom_call.1}
  #allocation0 [shape = 'u32[]', space=smem, size = 0x4, offset = 0x4, fixed_abs, tag = 'smem constant byte address 0x4 - core index']
  #allocation1 [shape = 'u32[144,128]{1,0:T(1,128)}', space=vmem, size = 0x12000, scoped, tag = 'internal scratch']
  #allocation2 [shape = 'f32[1,1]{1,0:T(1,128)S(1)}', space=vmem, size = 0x200, scoped, tag = 'scoped memory for tpu_custom_call.1']
  %s0 = inlined_call_operand.hbm [shape: f32[8,1,32], index: 0, kind: input, shape index: {}]
  %s1 = inlined_call_operand.vmem [shape: f32[8,8,32], index: 1, kind: input, shape index: {}]
  %s2 = inlined_call_operand.hbm [shape: f32[8,8,32], index: 2, kind: input, shape index: {}]
  %s3 = inlined_call_operand.hbm [shape: f32[8,1,8], index: 3, kind: input, shape index: {}]
  %s4 = inlined_call_operand.vmem [shape: f32[8,8,1], index: 4, kind: input, shape index: {}]
  %s5 = inlined_call_operand.vmem [shape: f32[1,1,32], index: 5, kind: input, shape index: {}]
  %s6 = inlined_call_operand.vmem [shape: f32[1,1,32], index: 6, kind: input, shape index: {}]
  %s7 = inlined_call_operand.<no memory space> [shape: f32[1,1], index: 7, kind: input, shape index: {}]
  %s8 = inlined_call_operand.vmem [shape: f32[1,32,64], index: 8, kind: input, shape index: {}]
  %s9 = inlined_call_operand.hbm [shape: f32[8,1,8], index: 9, kind: output, shape index: {0}]
  %s10 = inlined_call_operand.hbm [shape: f32[8,1,32], index: 10, kind: output, shape index: {1}]
  %11 = xla_tuple %s9, %s10
  %s12 = sld [smem:[#allocation0]]
  $region66: #{tpu_custom_call.1} parent=0
    _
  %s14 = ssub.s32 1, %s12
  %s15 = scalar_select 0, %s14, %s12
  %v16 = vstv %s7
  %17 = vst [vmem:[#allocation2] sm:$0x1] %v16
  $region1: #{tpu_custom_call.1} parent=0
    #allocation3 [shape = 'u8[4096]{0}', space=vmem, size = 0x1000, scoped, tag = 'input window, operand 0, single buffered']
    #allocation4 [shape = 's32[1]{0}', space=sflag, size = 0x4, scoped, tag = 'scoped memory for tpu_custom_call.1']
    #allocation5 [shape = 's32[1]{0}', space=sflag, size = 0x4, scoped, tag = 'scoped memory for tpu_custom_call.1']
    #allocation6 [shape = 'u8[32768]{0}', space=vmem, size = 0x8000, scoped, tag = 'input window, operand 2, single buffered']
    #allocation7 [shape = 's32[1]{0}', space=sflag, size = 0x4, scoped, tag = 'scoped memory for tpu_custom_call.1']
    #allocation8 [shape = 'u8[4096]{0}', space=vmem, size = 0x1000, scoped, tag = 'input window, operand 3, single buffered']
    #allocation9 [shape = 'u8[4096]{0}', space=vmem, size = 0x1000, scoped, tag = 'output window, operand 0, single buffered']
    #allocation10 [shape = 'u8[4096]{0}', space=vmem, size = 0x1000, scoped, tag = 'output window, operand 1, single buffered']
    #allocation11 [shape = 's32[1]{0}', space=sflag, size = 0x4, scoped, tag = 'scoped memory for tpu_custom_call.1']
    %18 = vsyncpa [#allocation4], 0
    %19 = vsyncpa [#allocation7], 0
    %20 = vsyncpa [#allocation5], 0
    %21 = vsyncpa [#allocation11], 0
    // Predicated region
    $region2: #{tpu_custom_call.1} parent=1 // pred_check
      _
    $region3: #{tpu_custom_call.1} parent=1 // pred_check_branch
      %23 = sbr.rel (0) target = $region5
    $region4: #{tpu_custom_call.1} parent=1 // pred_region
      %s25 = ssub.s32 128, 128
      %26 = vsyncadd [#allocation4], %s25
      %s27 = sshll.u32 [#allocation3], 4
      %s28 = int_to_ptr.vmem [resolvable:$true] %s27
      %33 = dma.hbm_to_vmem [thread:$0]  %s0, 128, %s28, [#allocation4], 16, 16, 1
    $region5: #{tpu_custom_call.1} parent=1 // pred_fallthru
      _
    // Predicated region
    $region6: #{tpu_custom_call.1} parent=1 // pred_check
      _
    $region7: #{tpu_custom_call.1} parent=1 // pred_check_branch
      %35 = sbr.rel (0) target = $region9
    $region8: #{tpu_custom_call.1} parent=1 // pred_region
      _
    $region9: #{tpu_custom_call.1} parent=1 // pred_fallthru
      _
    // Predicated region
    $region10: #{tpu_custom_call.1} parent=1 // pred_check
      _
    $region11: #{tpu_custom_call.1} parent=1 // pred_check_branch
      %37 = sbr.rel (0) target = $region13
    $region12: #{tpu_custom_call.1} parent=1 // pred_region
      %s39 = ssub.s32 1024, 1024
      %40 = vsyncadd [#allocation7], %s39
      %s41 = sshll.u32 [#allocation6], 4
      %s42 = int_to_ptr.vmem [resolvable:$true] %s41
      %47 = dma.hbm_to_vmem [thread:$0]  %s2, 1024, %s42, [#allocation7], 128, 128, 8
    $region13: #{tpu_custom_call.1} parent=1 // pred_fallthru
      _
    // Predicated region
    $region14: #{tpu_custom_call.1} parent=1 // pred_check
      _
    $region15: #{tpu_custom_call.1} parent=1 // pred_check_branch
      %49 = sbr.rel (0) target = $region17
    $region16: #{tpu_custom_call.1} parent=1 // pred_region
      %s51 = ssub.s32 128, 128
      %52 = vsyncadd [#allocation7], %s51
      %s53 = sshll.u32 [#allocation8], 4
      %s54 = int_to_ptr.vmem [resolvable:$true] %s53
      %59 = dma.hbm_to_vmem [thread:$0]  %s3, 128, %s54, [#allocation7], 16, 16, 1
    $region17: #{tpu_custom_call.1} parent=1 // pred_fallthru
      _
    // Predicated region
    $region18: #{tpu_custom_call.1} parent=1 // pred_check
      _
    $region19: #{tpu_custom_call.1} parent=1 // pred_check_branch
      %61 = sbr.rel (0) target = $region21
    $region20: #{tpu_custom_call.1} parent=1 // pred_region
      _
    $region21: #{tpu_custom_call.1} parent=1 // pred_fallthru
      _
    // Predicated region
    $region22: #{tpu_custom_call.1} parent=1 // pred_check
      _
    $region23: #{tpu_custom_call.1} parent=1 // pred_check_branch
      %63 = sbr.rel (0) target = $region25
    $region24: #{tpu_custom_call.1} parent=1 // pred_region
      _
    $region25: #{tpu_custom_call.1} parent=1 // pred_fallthru
      _
    // Predicated region
    $region26: #{tpu_custom_call.1} parent=1 // pred_check
      _
    $region27: #{tpu_custom_call.1} parent=1 // pred_check_branch
      %65 = sbr.rel (0) target = $region29
    $region28: #{tpu_custom_call.1} parent=1 // pred_region
      _
    $region29: #{tpu_custom_call.1} parent=1 // pred_fallthru
      _
    // Predicated region
    $region30: #{tpu_custom_call.1} parent=1 // pred_check
      _
    $region31: #{tpu_custom_call.1} parent=1 // pred_check_branch
      %67 = sbr.rel (0) target = $region33
    $region32: #{tpu_custom_call.1} parent=1 // pred_region
      _
    $region33: #{tpu_custom_call.1} parent=1 // pred_fallthru
      _
    // Predicated region
    $region34: #{tpu_custom_call.1} parent=1 // pred_check
      _
    $region35: #{tpu_custom_call.1} parent=1 // pred_check_branch
      %69 = sbr.rel (0) target = $region37
    $region36: #{tpu_custom_call.1} parent=1 // pred_region
      _
    $region37: #{tpu_custom_call.1} parent=1 // pred_fallthru
      _
    // Predicated region
    $region38: #{tpu_custom_call.1} parent=1 // pred_check
      _
    $region39: #{tpu_custom_call.1} parent=1 // pred_check_branch
      %71 = sbr.rel (0) target = $region41
    $region40: #{tpu_custom_call.1} parent=1 // pred_region
      %72 = dma.done [#allocation4], 128
    $region41: #{tpu_custom_call.1} parent=1 // pred_fallthru
      _
    // Predicated region
    $region42: #{tpu_custom_call.1} parent=1 // pred_check
      _
    $region43: #{tpu_custom_call.1} parent=1 // pred_check_branch
      %74 = sbr.rel (0) target = $region45
    $region44: #{tpu_custom_call.1} parent=1 // pred_region
      %75 = dma.done [#allocation7], 1024
    $region45: #{tpu_custom_call.1} parent=1 // pred_fallthru
      _
    // Predicated region
    $region46: #{tpu_custom_call.1} parent=1 // pred_check
      _
    $region47: #{tpu_custom_call.1} parent=1 // pred_check_branch
      %77 = sbr.rel (0) target = $region49
    $region48: #{tpu_custom_call.1} parent=1 // pred_region
      %78 = dma.done [#allocation7], 128
    $region49: #{tpu_custom_call.1} parent=1 // pred_fallthru
      _
    %v79 = vld [vmem:[#allocation3] sm:$0x1]
    %v80 = vld [vmem:[#allocation3 + $0x1] sm:$0x1]
    %v81 = vld [vmem:[#allocation3 + $0x2] sm:$0x1]
    %v82 = vld [vmem:[#allocation3 + $0x3] sm:$0x1]
    %v83 = vld [vmem:[#allocation3 + $0x4] sm:$0x1]
    %v84 = vld [vmem:[#allocation3 + $0x5] sm:$0x1]
    %v85 = vld [vmem:[#allocation3 + $0x6] sm:$0x1]
    %v86 = vld [vmem:[#allocation3 + $0x7] sm:$0x1]
    %v87 = vld [vmem:[%s1] sm:$0xff]
    %v88 = vld [vmem:[%s1 + $0x8] sm:$0xff]
    %v89 = vld [vmem:[%s1 + $0x10] sm:$0xff]
    %v90 = vld [vmem:[%s1 + $0x18] sm:$0xff]
    %v91 = vld [vmem:[%s1 + $0x20] sm:$0xff]
    %v92 = vld [vmem:[%s1 + $0x28] sm:$0xff]
    %v93 = vld [vmem:[%s1 + $0x30] sm:$0xff]
    %v94 = vld [vmem:[%s1 + $0x38] sm:$0xff]
    %v95 = vld [vmem:[#allocation6] sm:$0xff]
    %v96 = vld [vmem:[#allocation6 + $0x8] sm:$0xff]
    %v97 = vld [vmem:[#allocation6 + $0x10] sm:$0xff]
    %v98 = vld [vmem:[#allocation6 + $0x18] sm:$0xff]
    %v99 = vld [vmem:[#allocation6 + $0x20] sm:$0xff]
    %v100 = vld [vmem:[#allocation6 + $0x28] sm:$0xff]
    %v101 = vld [vmem:[#allocation6 + $0x30] sm:$0xff]
    %v102 = vld [vmem:[#allocation6 + $0x38] sm:$0xff]
    %v103 = vld [vmem:[#allocation8] sm:$0x1]
    %v104 = vld [vmem:[#allocation8 + $0x1] sm:$0x1]
    %v105 = vld [vmem:[#allocation8 + $0x2] sm:$0x1]
    %v106 = vld [vmem:[#allocation8 + $0x3] sm:$0x1]
    %v107 = vld [vmem:[#allocation8 + $0x4] sm:$0x1]
    %v108 = vld [vmem:[#allocation8 + $0x5] sm:$0x1]
    %v109 = vld [vmem:[#allocation8 + $0x6] sm:$0x1]
    %v110 = vld [vmem:[#allocation8 + $0x7] sm:$0x1]
    %v111 = vld [vmem:[%s4] sm:$0xff]
    %v112 = vld [vmem:[%s4 + $0x8] sm:$0xff]
    %v113 = vld [vmem:[%s4 + $0x10] sm:$0xff]
    %v114 = vld [vmem:[%s4 + $0x18] sm:$0xff]
    %v115 = vld [vmem:[%s4 + $0x20] sm:$0xff]
    %v116 = vld [vmem:[%s4 + $0x28] sm:$0xff]
    %v117 = vld [vmem:[%s4 + $0x30] sm:$0xff]
    %v118 = vld [vmem:[%s4 + $0x38] sm:$0xff]
    %v119 = vld [vmem:[%s5] sm:$0x1]
    %v120 = vmul.f32 %v79, %v119
    %v121 = vmul.f32 %v80, %v119
    %v122 = vmul.f32 %v81, %v119
    %v123 = vmul.f32 %v82, %v119
    %v124 = vmul.f32 %v83, %v119
    %v125 = vmul.f32 %v84, %v119
    %v126 = vmul.f32 %v85, %v119
    %v127 = vmul.f32 %v86, %v119
    %vm128 = vcmask 253952
    %v129 = vsel %vm128, %v120, 0.0
    %130 = vadd.xlane.f32.xlu0 %v129
    %v131 = vpop.xlane.xlu0 %130
    %v132 = vsel %vm128, %v121, 0.0
    %133 = vadd.xlane.f32.xlu0 %v132
    %v134 = vpop.xlane.xlu0 %133
    %v135 = vsel %vm128, %v122, 0.0
    %136 = vadd.xlane.f32.xlu0 %v135
    %v137 = vpop.xlane.xlu0 %136
    %v138 = vsel %vm128, %v123, 0.0
    %139 = vadd.xlane.f32.xlu0 %v138
    %v140 = vpop.xlane.xlu0 %139
    %v141 = vsel %vm128, %v124, 0.0
    %142 = vadd.xlane.f32.xlu0 %v141
    %v143 = vpop.xlane.xlu0 %142
    %v144 = vsel %vm128, %v125, 0.0
    %145 = vadd.xlane.f32.xlu0 %v144
    %v146 = vpop.xlane.xlu0 %145
    %v147 = vsel %vm128, %v126, 0.0
    %148 = vadd.xlane.f32.xlu0 %v147
    %v149 = vpop.xlane.xlu0 %148
    %v150 = vsel %vm128, %v127, 0.0
    %151 = vadd.xlane.f32.xlu0 %v150
    %v152 = vpop.xlane.xlu0 %151
    %v153 = vld [vmem:[%s6] sm:$0x1]
    %vm154 = vcmask 261120
    %v156 = vsel %vm154, %v153, 0
    %v159 = vsel %vm154, %v87, 0
    %161 = vmatprep.subr.mxu0 0.0
    %162 = vmatpush1.xpose.msra.mxu0 %v159
    %163 = vmatprep.subr.mxu0 0.0
    %164 = vmatpush1.xpose.msra.mxu0 0.0
    %165 = vmatprep.subr.mxu0 0.0
    %166 = vmatpush1.xpose.msra.mxu0 0.0
    %167 = vmatprep.subr.mxu0 0.0
    %168 = vmatpush1.xpose.msra.mxu0 0.0
    %169 = vmatprep.subr.mxu0 0.0
    %170 = vmatpush1.xpose.msra.mxu0 0.0
    %171 = vmatprep.subr.mxu0 0.0
    %172 = vmatpush1.xpose.msra.mxu0 0.0
    %173 = vmatprep.subr.mxu0 0.0
    %174 = vmatpush1.xpose.msra.mxu0 0.0
    %175 = vmatprep.subr.mxu0 0.0
    %176 = vmatpush1.xpose.msra.mxu0 0.0
    %177 = vmatprep.subr.mxu0 0.0
    %178 = vmatpush1.xpose.msra.mxu0 0.0
    %179 = vmatprep.subr.mxu0 0.0
    %180 = vmatpush1.xpose.msra.mxu0 0.0
    %181 = vmatprep.subr.mxu0 0.0
    %182 = vmatpush1.xpose.msra.mxu0 0.0
    %183 = vmatprep.subr.mxu0 0.0
    %184 = vmatpush1.xpose.msra.mxu0 0.0
    %185 = vmatprep.subr.mxu0 0.0
    %186 = vmatpush1.xpose.msra.mxu0 0.0
    %187 = vmatprep.subr.mxu0 0.0
    %188 = vmatpush1.xpose.msra.mxu0 0.0
    %189 = vmatprep.subr.mxu0 0.0
    %190 = vmatpush1.xpose.msra.mxu0 0.0
    %191 = vmatprep.subr.mxu0 0.0
    %192 = vmatpush1.xpose.msra.mxu0 0.0
    %193 = vmatprep.subr.mxu0 0.0
    %194 = vmatpush1.xpose.msra.mxu0 0.0
    %195 = vmatprep.subr.mxu0 0.0
    %196 = vmatpush1.xpose.msra.mxu0 0.0
    %197 = vmatprep.subr.mxu0 0.0
    %198 = vmatpush1.xpose.msra.mxu0 0.0
    %199 = vmatprep.subr.mxu0 0.0
    %200 = vmatpush1.xpose.msra.mxu0 0.0
    %201 = vmatprep.subr.mxu0 0.0
    %202 = vmatpush1.xpose.msra.mxu0 0.0
    %203 = vmatprep.subr.mxu0 0.0
    %204 = vmatpush1.xpose.msra.mxu0 0.0
    %205 = vmatprep.subr.mxu0 0.0
    %206 = vmatpush1.xpose.msra.mxu0 0.0
    %207 = vmatprep.subr.mxu0 0.0
    %208 = vmatpush1.xpose.msra.mxu0 0.0
    %209 = vmatprep.subr.mxu0 0.0
    %210 = vmatpush1.xpose.msra.mxu0 0.0
    %211 = vmatprep.subr.mxu0 0.0
    %212 = vmatpush1.xpose.msra.mxu0 0.0
    %213 = vmatprep.subr.mxu0 0.0
    %214 = vmatpush1.xpose.msra.mxu0 0.0
    %215 = vmatprep.subr.mxu0 0.0
    %216 = vmatpush1.xpose.msra.mxu0 0.0
    %217 = vmatprep.subr.mxu0 0.0
    %218 = vmatpush1.xpose.msra.mxu0 0.0
    %219 = vmatprep.subr.mxu0 0.0
    %220 = vmatpush1.xpose.msra.mxu0 0.0
    %221 = vmatprep.subr.mxu0 0.0
    %222 = vmatpush1.xpose.msra.mxu0 0.0
    %223 = vmatprep.subr.mxu0 0.0
    %224 = vmatpush1.xpose.msra.mxu0 0.0
    %225 = vmatprep.mubr.f32.mxu0 0.0
    %226 = vmatmul.mubr.f32.gmra.mrb[0].mxu0 %v156
    %v227 = vpop.f32.mrb[0].mxu0
    %v228 = vadd.f32 %v131, %v227
    %v229 = vpop.f32.mrb[0].mxu0
    %230 = vdwg.mxu0
    %v232 = vsel %vm154, %v88, 0
    %234 = vmatprep.subr.mxu0 0.0
    %235 = vmatpush1.xpose.msra.mxu0 %v232
    %236 = vmatprep.subr.mxu0 0.0
    %237 = vmatpush1.xpose.msra.mxu0 0.0
    %238 = vmatprep.subr.mxu0 0.0
    %239 = vmatpush1.xpose.msra.mxu0 0.0
    %240 = vmatprep.subr.mxu0 0.0
    %241 = vmatpush1.xpose.msra.mxu0 0.0
    %242 = vmatprep.subr.mxu0 0.0
    %243 = vmatpush1.xpose.msra.mxu0 0.0
    %244 = vmatprep.subr.mxu0 0.0
    %245 = vmatpush1.xpose.msra.mxu0 0.0
    %246 = vmatprep.subr.mxu0 0.0
    %247 = vmatpush1.xpose.msra.mxu0 0.0
    %248 = vmatprep.subr.mxu0 0.0
    %249 = vmatpush1.xpose.msra.mxu0 0.0
    %250 = vmatprep.subr.mxu0 0.0
    %251 = vmatpush1.xpose.msra.mxu0 0.0
    %252 = vmatprep.subr.mxu0 0.0
    %253 = vmatpush1.xpose.msra.mxu0 0.0
    %254 = vmatprep.subr.mxu0 0.0
    %255 = vmatpush1.xpose.msra.mxu0 0.0
    %256 = vmatprep.subr.mxu0 0.0
    %257 = vmatpush1.xpose.msra.mxu0 0.0
    %258 = vmatprep.subr.mxu0 0.0
    %259 = vmatpush1.xpose.msra.mxu0 0.0
    %260 = vmatprep.subr.mxu0 0.0
    %261 = vmatpush1.xpose.msra.mxu0 0.0
    %262 = vmatprep.subr.mxu0 0.0
    %263 = vmatpush1.xpose.msra.mxu0 0.0
    %264 = vmatprep.subr.mxu0 0.0
    %265 = vmatpush1.xpose.msra.mxu0 0.0
    %266 = vmatprep.subr.mxu0 0.0
    %267 = vmatpush1.xpose.msra.mxu0 0.0
    %268 = vmatprep.subr.mxu0 0.0
    %269 = vmatpush1.xpose.msra.mxu0 0.0
    %270 = vmatprep.subr.mxu0 0.0
    %271 = vmatpush1.xpose.msra.mxu0 0.0
    %272 = vmatprep.subr.mxu0 0.0
    %273 = vmatpush1.xpose.msra.mxu0 0.0
    %274 = vmatprep.subr.mxu0 0.0
    %275 = vmatpush1.xpose.msra.mxu0 0.0
    %276 = vmatprep.subr.mxu0 0.0
    %277 = vmatpush1.xpose.msra.mxu0 0.0
    %278 = vmatprep.subr.mxu0 0.0
    %279 = vmatpush1.xpose.msra.mxu0 0.0
    %280 = vmatprep.subr.mxu0 0.0
    %281 = vmatpush1.xpose.msra.mxu0 0.0
    %282 = vmatprep.subr.mxu0 0.0
    %283 = vmatpush1.xpose.msra.mxu0 0.0
    %284 = vmatprep.subr.mxu0 0.0
    %285 = vmatpush1.xpose.msra.mxu0 0.0
    %286 = vmatprep.subr.mxu0 0.0
    %287 = vmatpush1.xpose.msra.mxu0 0.0
    %288 = vmatprep.subr.mxu0 0.0
    %289 = vmatpush1.xpose.msra.mxu0 0.0
    %290 = vmatprep.subr.mxu0 0.0
    %291 = vmatpush1.xpose.msra.mxu0 0.0
    %292 = vmatprep.subr.mxu0 0.0
    %293 = vmatpush1.xpose.msra.mxu0 0.0
    %294 = vmatprep.subr.mxu0 0.0
    %295 = vmatpush1.xpose.msra.mxu0 0.0
    %296 = vmatprep.subr.mxu0 0.0
    %297 = vmatpush1.xpose.msra.mxu0 0.0
    %298 = vmatprep.mubr.f32.mxu0 0.0
    %299 = vmatmul.mubr.f32.gmra.mrb[0].mxu0 %v156
    %v300 = vpop.f32.mrb[0].mxu0
    %v301 = vadd.f32 %v134, %v300
    %v302 = vpop.f32.mrb[0].mxu0
    %303 = vdwg.mxu0
    %v305 = vsel %vm154, %v89, 0
    %307 = vmatprep.subr.mxu0 0.0
    %308 = vmatpush1.xpose.msra.mxu0 %v305
    %309 = vmatprep.subr.mxu0 0.0
    %310 = vmatpush1.xpose.msra.mxu0 0.0
    %311 = vmatprep.subr.mxu0 0.0
    %312 = vmatpush1.xpose.msra.mxu0 0.0
    %313 = vmatprep.subr.mxu0 0.0
    %314 = vmatpush1.xpose.msra.mxu0 0.0
    %315 = vmatprep.subr.mxu0 0.0
    %316 = vmatpush1.xpose.msra.mxu0 0.0
    %317 = vmatprep.subr.mxu0 0.0
    %318 = vmatpush1.xpose.msra.mxu0 0.0
    %319 = vmatprep.subr.mxu0 0.0
    %320 = vmatpush1.xpose.msra.mxu0 0.0
    %321 = vmatprep.subr.mxu0 0.0
    %322 = vmatpush1.xpose.msra.mxu0 0.0
    %323 = vmatprep.subr.mxu0 0.0
    %324 = vmatpush1.xpose.msra.mxu0 0.0
    %325 = vmatprep.subr.mxu0 0.0
    %326 = vmatpush1.xpose.msra.mxu0 0.0
    %327 = vmatprep.subr.mxu0 0.0
    %328 = vmatpush1.xpose.msra.mxu0 0.0
    %329 = vmatprep.subr.mxu0 0.0
    %330 = vmatpush1.xpose.msra.mxu0 0.0
    %331 = vmatprep.subr.mxu0 0.0
    %332 = vmatpush1.xpose.msra.mxu0 0.0
    %333 = vmatprep.subr.mxu0 0.0
    %334 = vmatpush1.xpose.msra.mxu0 0.0
    %335 = vmatprep.subr.mxu0 0.0
    %336 = vmatpush1.xpose.msra.mxu0 0.0
    %337 = vmatprep.subr.mxu0 0.0
    %338 = vmatpush1.xpose.msra.mxu0 0.0
    %339 = vmatprep.subr.mxu0 0.0
    %340 = vmatpush1.xpose.msra.mxu0 0.0
    %341 = vmatprep.subr.mxu0 0.0
    %342 = vmatpush1.xpose.msra.mxu0 0.0
    %343 = vmatprep.subr.mxu0 0.0
    %344 = vmatpush1.xpose.msra.mxu0 0.0
    %345 = vmatprep.subr.mxu0 0.0
    %346 = vmatpush1.xpose.msra.mxu0 0.0
    %347 = vmatprep.subr.mxu0 0.0
    %348 = vmatpush1.xpose.msra.mxu0 0.0
    %349 = vmatprep.subr.mxu0 0.0
    %350 = vmatpush1.xpose.msra.mxu0 0.0
    %351 = vmatprep.subr.mxu0 0.0
    %352 = vmatpush1.xpose.msra.mxu0 0.0
    %353 = vmatprep.subr.mxu0 0.0
    %354 = vmatpush1.xpose.msra.mxu0 0.0
    %355 = vmatprep.subr.mxu0 0.0
    %356 = vmatpush1.xpose.msra.mxu0 0.0
    %357 = vmatprep.subr.mxu0 0.0
    %358 = vmatpush1.xpose.msra.mxu0 0.0
    %359 = vmatprep.subr.mxu0 0.0
    %360 = vmatpush1.xpose.msra.mxu0 0.0
    %361 = vmatprep.subr.mxu0 0.0
    %362 = vmatpush1.xpose.msra.mxu0 0.0
    %363 = vmatprep.subr.mxu0 0.0
    %364 = vmatpush1.xpose.msra.mxu0 0.0
    %365 = vmatprep.subr.mxu0 0.0
    %366 = vmatpush1.xpose.msra.mxu0 0.0
    %367 = vmatprep.subr.mxu0 0.0
    %368 = vmatpush1.xpose.msra.mxu0 0.0
    %369 = vmatprep.subr.mxu0 0.0
    %370 = vmatpush1.xpose.msra.mxu0 0.0
    %371 = vmatprep.mubr.f32.mxu0 0.0
    %372 = vmatmul.mubr.f32.gmra.mrb[0].mxu0 %v156
    %v373 = vpop.f32.mrb[0].mxu0
    %v374 = vadd.f32 %v137, %v373
    %v375 = vpop.f32.mrb[0].mxu0
    %376 = vdwg.mxu0
    %v378 = vsel %vm154, %v90, 0
    %380 = vmatprep.subr.mxu0 0.0
    %381 = vmatpush1.xpose.msra.mxu0 %v378
    %382 = vmatprep.subr.mxu0 0.0
    %383 = vmatpush1.xpose.msra.mxu0 0.0
    %384 = vmatprep.subr.mxu0 0.0
    %385 = vmatpush1.xpose.msra.mxu0 0.0
    %386 = vmatprep.subr.mxu0 0.0
    %387 = vmatpush1.xpose.msra.mxu0 0.0
    %388 = vmatprep.subr.mxu0 0.0
    %389 = vmatpush1.xpose.msra.mxu0 0.0
    %390 = vmatprep.subr.mxu0 0.0
    %391 = vmatpush1.xpose.msra.mxu0 0.0
    %392 = vmatprep.subr.mxu0 0.0
    %393 = vmatpush1.xpose.msra.mxu0 0.0
    %394 = vmatprep.subr.mxu0 0.0
    %395 = vmatpush1.xpose.msra.mxu0 0.0
    %396 = vmatprep.subr.mxu0 0.0
    %397 = vmatpush1.xpose.msra.mxu0 0.0
    %398 = vmatprep.subr.mxu0 0.0
    %399 = vmatpush1.xpose.msra.mxu0 0.0
    %400 = vmatprep.subr.mxu0 0.0
    %401 = vmatpush1.xpose.msra.mxu0 0.0
    %402 = vmatprep.subr.mxu0 0.0
    %403 = vmatpush1.xpose.msra.mxu0 0.0
    %404 = vmatprep.subr.mxu0 0.0
    %405 = vmatpush1.xpose.msra.mxu0 0.0
    %406 = vmatprep.subr.mxu0 0.0
    %407 = vmatpush1.xpose.msra.mxu0 0.0
    %408 = vmatprep.subr.mxu0 0.0
    %409 = vmatpush1.xpose.msra.mxu0 0.0
    %410 = vmatprep.subr.mxu0 0.0
    %411 = vmatpush1.xpose.msra.mxu0 0.0
    %412 = vmatprep.subr.mxu0 0.0
    %413 = vmatpush1.xpose.msra.mxu0 0.0
    %414 = vmatprep.subr.mxu0 0.0
    %415 = vmatpush1.xpose.msra.mxu0 0.0
    %416 = vmatprep.subr.mxu0 0.0
    %417 = vmatpush1.xpose.msra.mxu0 0.0
    %418 = vmatprep.subr.mxu0 0.0
    %419 = vmatpush1.xpose.msra.mxu0 0.0
    %420 = vmatprep.subr.mxu0 0.0
    %421 = vmatpush1.xpose.msra.mxu0 0.0
    %422 = vmatprep.subr.mxu0 0.0
    %423 = vmatpush1.xpose.msra.mxu0 0.0
    %424 = vmatprep.subr.mxu0 0.0
    %425 = vmatpush1.xpose.msra.mxu0 0.0
    %426 = vmatprep.subr.mxu0 0.0
    %427 = vmatpush1.xpose.msra.mxu0 0.0
    %428 = vmatprep.subr.mxu0 0.0
    %429 = vmatpush1.xpose.msra.mxu0 0.0
    %430 = vmatprep.subr.mxu0 0.0
    %431 = vmatpush1.xpose.msra.mxu0 0.0
    %432 = vmatprep.subr.mxu0 0.0
    %433 = vmatpush1.xpose.msra.mxu0 0.0
    %434 = vmatprep.subr.mxu0 0.0
    %435 = vmatpush1.xpose.msra.mxu0 0.0
    %436 = vmatprep.subr.mxu0 0.0
    %437 = vmatpush1.xpose.msra.mxu0 0.0
    %438 = vmatprep.subr.mxu0 0.0
    %439 = vmatpush1.xpose.msra.mxu0 0.0
    %440 = vmatprep.subr.mxu0 0.0
    %441 = vmatpush1.xpose.msra.mxu0 0.0
    %442 = vmatprep.subr.mxu0 0.0
    %443 = vmatpush1.xpose.msra.mxu0 0.0
    %444 = vmatprep.mubr.f32.mxu0 0.0
    %445 = vmatmul.mubr.f32.gmra.mrb[0].mxu0 %v156
    %v446 = vpop.f32.mrb[0].mxu0
    %v447 = vadd.f32 %v140, %v446
    %v448 = vpop.f32.mrb[0].mxu0
    %449 = vdwg.mxu0
    %v451 = vsel %vm154, %v91, 0
    %453 = vmatprep.subr.mxu0 0.0
    %454 = vmatpush1.xpose.msra.mxu0 %v451
    %455 = vmatprep.subr.mxu0 0.0
    %456 = vmatpush1.xpose.msra.mxu0 0.0
    %457 = vmatprep.subr.mxu0 0.0
    %458 = vmatpush1.xpose.msra.mxu0 0.0
    %459 = vmatprep.subr.mxu0 0.0
    %460 = vmatpush1.xpose.msra.mxu0 0.0
    %461 = vmatprep.subr.mxu0 0.0
    %462 = vmatpush1.xpose.msra.mxu0 0.0
    %463 = vmatprep.subr.mxu0 0.0
    %464 = vmatpush1.xpose.msra.mxu0 0.0
    %465 = vmatprep.subr.mxu0 0.0
    %466 = vmatpush1.xpose.msra.mxu0 0.0
    %467 = vmatprep.subr.mxu0 0.0
    %468 = vmatpush1.xpose.msra.mxu0 0.0
    %469 = vmatprep.subr.mxu0 0.0
    %470 = vmatpush1.xpose.msra.mxu0 0.0
    %471 = vmatprep.subr.mxu0 0.0
    %472 = vmatpush1.xpose.msra.mxu0 0.0
    %473 = vmatprep.subr.mxu0 0.0
    %474 = vmatpush1.xpose.msra.mxu0 0.0
    %475 = vmatprep.subr.mxu0 0.0
    %476 = vmatpush1.xpose.msra.mxu0 0.0
    %477 = vmatprep.subr.mxu0 0.0
    %478 = vmatpush1.xpose.msra.mxu0 0.0
    %479 = vmatprep.subr.mxu0 0.0
    %480 = vmatpush1.xpose.msra.mxu0 0.0
    %481 = vmatprep.subr.mxu0 0.0
    %482 = vmatpush1.xpose.msra.mxu0 0.0
    %483 = vmatprep.subr.mxu0 0.0
    %484 = vmatpush1.xpose.msra.mxu0 0.0
    %485 = vmatprep.subr.mxu0 0.0
    %486 = vmatpush1.xpose.msra.mxu0 0.0
    %487 = vmatprep.subr.mxu0 0.0
    %488 = vmatpush1.xpose.msra.mxu0 0.0
    %489 = vmatprep.subr.mxu0 0.0
    %490 = vmatpush1.xpose.msra.mxu0 0.0
    %491 = vmatprep.subr.mxu0 0.0
    %492 = vmatpush1.xpose.msra.mxu0 0.0
    %493 = vmatprep.subr.mxu0 0.0
    %494 = vmatpush1.xpose.msra.mxu0 0.0
    %495 = vmatprep.subr.mxu0 0.0
    %496 = vmatpush1.xpose.msra.mxu0 0.0
    %497 = vmatprep.subr.mxu0 0.0
    %498 = vmatpush1.xpose.msra.mxu0 0.0
    %499 = vmatprep.subr.mxu0 0.0
    %500 = vmatpush1.xpose.msra.mxu0 0.0
    %501 = vmatprep.subr.mxu0 0.0
    %502 = vmatpush1.xpose.msra.mxu0 0.0
    %503 = vmatprep.subr.mxu0 0.0
    %504 = vmatpush1.xpose.msra.mxu0 0.0
    %505 = vmatprep.subr.mxu0 0.0
    %506 = vmatpush1.xpose.msra.mxu0 0.0
    %507 = vmatprep.subr.mxu0 0.0
    %508 = vmatpush1.xpose.msra.mxu0 0.0
    %509 = vmatprep.subr.mxu0 0.0
    %510 = vmatpush1.xpose.msra.mxu0 0.0
    %511 = vmatprep.subr.mxu0 0.0
    %512 = vmatpush1.xpose.msra.mxu0 0.0
    %513 = vmatprep.subr.mxu0 0.0
    %514 = vmatpush1.xpose.msra.mxu0 0.0
    %515 = vmatprep.subr.mxu0 0.0
    %516 = vmatpush1.xpose.msra.mxu0 0.0
    %517 = vmatprep.mubr.f32.mxu0 0.0
    %518 = vmatmul.mubr.f32.gmra.mrb[0].mxu0 %v156
    %v519 = vpop.f32.mrb[0].mxu0
    %v520 = vadd.f32 %v143, %v519
    %v521 = vpop.f32.mrb[0].mxu0
    %522 = vdwg.mxu0
    %v524 = vsel %vm154, %v92, 0
    %526 = vmatprep.subr.mxu0 0.0
    %527 = vmatpush1.xpose.msra.mxu0 %v524
    %528 = vmatprep.subr.mxu0 0.0
    %529 = vmatpush1.xpose.msra.mxu0 0.0
    %530 = vmatprep.subr.mxu0 0.0
    %531 = vmatpush1.xpose.msra.mxu0 0.0
    %532 = vmatprep.subr.mxu0 0.0
    %533 = vmatpush1.xpose.msra.mxu0 0.0
    %534 = vmatprep.subr.mxu0 0.0
    %535 = vmatpush1.xpose.msra.mxu0 0.0
    %536 = vmatprep.subr.mxu0 0.0
    %537 = vmatpush1.xpose.msra.mxu0 0.0
    %538 = vmatprep.subr.mxu0 0.0
    %539 = vmatpush1.xpose.msra.mxu0 0.0
    %540 = vmatprep.subr.mxu0 0.0
    %541 = vmatpush1.xpose.msra.mxu0 0.0
    %542 = vmatprep.subr.mxu0 0.0
    %543 = vmatpush1.xpose.msra.mxu0 0.0
    %544 = vmatprep.subr.mxu0 0.0
    %545 = vmatpush1.xpose.msra.mxu0 0.0
    %546 = vmatprep.subr.mxu0 0.0
    %547 = vmatpush1.xpose.msra.mxu0 0.0
    %548 = vmatprep.subr.mxu0 0.0
    %549 = vmatpush1.xpose.msra.mxu0 0.0
    %550 = vmatprep.subr.mxu0 0.0
    %551 = vmatpush1.xpose.msra.mxu0 0.0
    %552 = vmatprep.subr.mxu0 0.0
    %553 = vmatpush1.xpose.msra.mxu0 0.0
    %554 = vmatprep.subr.mxu0 0.0
    %555 = vmatpush1.xpose.msra.mxu0 0.0
    %556 = vmatprep.subr.mxu0 0.0
    %557 = vmatpush1.xpose.msra.mxu0 0.0
    %558 = vmatprep.subr.mxu0 0.0
    %559 = vmatpush1.xpose.msra.mxu0 0.0
    %560 = vmatprep.subr.mxu0 0.0
    %561 = vmatpush1.xpose.msra.mxu0 0.0
    %562 = vmatprep.subr.mxu0 0.0
    %563 = vmatpush1.xpose.msra.mxu0 0.0
    %564 = vmatprep.subr.mxu0 0.0
    %565 = vmatpush1.xpose.msra.mxu0 0.0
    %566 = vmatprep.subr.mxu0 0.0
    %567 = vmatpush1.xpose.msra.mxu0 0.0
    %568 = vmatprep.subr.mxu0 0.0
    %569 = vmatpush1.xpose.msra.mxu0 0.0
    %570 = vmatprep.subr.mxu0 0.0
    %571 = vmatpush1.xpose.msra.mxu0 0.0
    %572 = vmatprep.subr.mxu0 0.0
    %573 = vmatpush1.xpose.msra.mxu0 0.0
    %574 = vmatprep.subr.mxu0 0.0
    %575 = vmatpush1.xpose.msra.mxu0 0.0
    %576 = vmatprep.subr.mxu0 0.0
    %577 = vmatpush1.xpose.msra.mxu0 0.0
    %578 = vmatprep.subr.mxu0 0.0
    %579 = vmatpush1.xpose.msra.mxu0 0.0
    %580 = vmatprep.subr.mxu0 0.0
    %581 = vmatpush1.xpose.msra.mxu0 0.0
    %582 = vmatprep.subr.mxu0 0.0
    %583 = vmatpush1.xpose.msra.mxu0 0.0
    %584 = vmatprep.subr.mxu0 0.0
    %585 = vmatpush1.xpose.msra.mxu0 0.0
    %586 = vmatprep.subr.mxu0 0.0
    %587 = vmatpush1.xpose.msra.mxu0 0.0
    %588 = vmatprep.subr.mxu0 0.0
    %589 = vmatpush1.xpose.msra.mxu0 0.0
    %590 = vmatprep.mubr.f32.mxu0 0.0
    %591 = vmatmul.mubr.f32.gmra.mrb[0].mxu0 %v156
    %v592 = vpop.f32.mrb[0].mxu0
    %v593 = vadd.f32 %v146, %v592
    %v594 = vpop.f32.mrb[0].mxu0
    %595 = vdwg.mxu0
    %v597 = vsel %vm154, %v93, 0
    %599 = vmatprep.subr.mxu0 0.0
    %600 = vmatpush1.xpose.msra.mxu0 %v597
    %601 = vmatprep.subr.mxu0 0.0
    %602 = vmatpush1.xpose.msra.mxu0 0.0
    %603 = vmatprep.subr.mxu0 0.0
    %604 = vmatpush1.xpose.msra.mxu0 0.0
    %605 = vmatprep.subr.mxu0 0.0
    %606 = vmatpush1.xpose.msra.mxu0 0.0
    %607 = vmatprep.subr.mxu0 0.0
    %608 = vmatpush1.xpose.msra.mxu0 0.0
    %609 = vmatprep.subr.mxu0 0.0
    %610 = vmatpush1.xpose.msra.mxu0 0.0
    %611 = vmatprep.subr.mxu0 0.0
    %612 = vmatpush1.xpose.msra.mxu0 0.0
    %613 = vmatprep.subr.mxu0 0.0
    %614 = vmatpush1.xpose.msra.mxu0 0.0
    %615 = vmatprep.subr.mxu0 0.0
    %616 = vmatpush1.xpose.msra.mxu0 0.0
    %617 = vmatprep.subr.mxu0 0.0
    %618 = vmatpush1.xpose.msra.mxu0 0.0
    %619 = vmatprep.subr.mxu0 0.0
    %620 = vmatpush1.xpose.msra.mxu0 0.0
    %621 = vmatprep.subr.mxu0 0.0
    %622 = vmatpush1.xpose.msra.mxu0 0.0
    %623 = vmatprep.subr.mxu0 0.0
    %624 = vmatpush1.xpose.msra.mxu0 0.0
    %625 = vmatprep.subr.mxu0 0.0
    %626 = vmatpush1.xpose.msra.mxu0 0.0
    %627 = vmatprep.subr.mxu0 0.0
    %628 = vmatpush1.xpose.msra.mxu0 0.0
    %629 = vmatprep.subr.mxu0 0.0
    %630 = vmatpush1.xpose.msra.mxu0 0.0
    %631 = vmatprep.subr.mxu0 0.0
    %632 = vmatpush1.xpose.msra.mxu0 0.0
    %633 = vmatprep.subr.mxu0 0.0
    %634 = vmatpush1.xpose.msra.mxu0 0.0
    %635 = vmatprep.subr.mxu0 0.0
    %636 = vmatpush1.xpose.msra.mxu0 0.0
    %637 = vmatprep.subr.mxu0 0.0
    %638 = vmatpush1.xpose.msra.mxu0 0.0
    %639 = vmatprep.subr.mxu0 0.0
    %640 = vmatpush1.xpose.msra.mxu0 0.0
    %641 = vmatprep.subr.mxu0 0.0
    %642 = vmatpush1.xpose.msra.mxu0 0.0
    %643 = vmatprep.subr.mxu0 0.0
    %644 = vmatpush1.xpose.msra.mxu0 0.0
    %645 = vmatprep.subr.mxu0 0.0
    %646 = vmatpush1.xpose.msra.mxu0 0.0
    %647 = vmatprep.subr.mxu0 0.0
    %648 = vmatpush1.xpose.msra.mxu0 0.0
    %649 = vmatprep.subr.mxu0 0.0
    %650 = vmatpush1.xpose.msra.mxu0 0.0
    %651 = vmatprep.subr.mxu0 0.0
    %652 = vmatpush1.xpose.msra.mxu0 0.0
    %653 = vmatprep.subr.mxu0 0.0
    %654 = vmatpush1.xpose.msra.mxu0 0.0
    %655 = vmatprep.subr.mxu0 0.0
    %656 = vmatpush1.xpose.msra.mxu0 0.0
    %657 = vmatprep.subr.mxu0 0.0
    %658 = vmatpush1.xpose.msra.mxu0 0.0
    %659 = vmatprep.subr.mxu0 0.0
    %660 = vmatpush1.xpose.msra.mxu0 0.0
    %661 = vmatprep.subr.mxu0 0.0
    %662 = vmatpush1.xpose.msra.mxu0 0.0
    %663 = vmatprep.mubr.f32.mxu0 0.0
    %664 = vmatmul.mubr.f32.gmra.mrb[0].mxu0 %v156
    %v665 = vpop.f32.mrb[0].mxu0
    %v666 = vadd.f32 %v149, %v665
    %v667 = vpop.f32.mrb[0].mxu0
    %668 = vdwg.mxu0
    %v670 = vsel %vm154, %v94, 0
    %672 = vmatprep.subr.mxu0 0.0
    %673 = vmatpush1.xpose.msra.mxu0 %v670
    %674 = vmatprep.subr.mxu0 0.0
    %675 = vmatpush1.xpose.msra.mxu0 0.0
    %676 = vmatprep.subr.mxu0 0.0
    %677 = vmatpush1.xpose.msra.mxu0 0.0
    %678 = vmatprep.subr.mxu0 0.0
    %679 = vmatpush1.xpose.msra.mxu0 0.0
    %680 = vmatprep.subr.mxu0 0.0
    %681 = vmatpush1.xpose.msra.mxu0 0.0
    %682 = vmatprep.subr.mxu0 0.0
    %683 = vmatpush1.xpose.msra.mxu0 0.0
    %684 = vmatprep.subr.mxu0 0.0
    %685 = vmatpush1.xpose.msra.mxu0 0.0
    %686 = vmatprep.subr.mxu0 0.0
    %687 = vmatpush1.xpose.msra.mxu0 0.0
    %688 = vmatprep.subr.mxu0 0.0
    %689 = vmatpush1.xpose.msra.mxu0 0.0
    %690 = vmatprep.subr.mxu0 0.0
    %691 = vmatpush1.xpose.msra.mxu0 0.0
    %692 = vmatprep.subr.mxu0 0.0
    %693 = vmatpush1.xpose.msra.mxu0 0.0
    %694 = vmatprep.subr.mxu0 0.0
    %695 = vmatpush1.xpose.msra.mxu0 0.0
    %696 = vmatprep.subr.mxu0 0.0
    %697 = vmatpush1.xpose.msra.mxu0 0.0
    %698 = vmatprep.subr.mxu0 0.0
    %699 = vmatpush1.xpose.msra.mxu0 0.0
    %700 = vmatprep.subr.mxu0 0.0
    %701 = vmatpush1.xpose.msra.mxu0 0.0
    %702 = vmatprep.subr.mxu0 0.0
    %703 = vmatpush1.xpose.msra.mxu0 0.0
    %704 = vmatprep.subr.mxu0 0.0
    %705 = vmatpush1.xpose.msra.mxu0 0.0
    %706 = vmatprep.subr.mxu0 0.0
    %707 = vmatpush1.xpose.msra.mxu0 0.0
    %708 = vmatprep.subr.mxu0 0.0
    %709 = vmatpush1.xpose.msra.mxu0 0.0
    %710 = vmatprep.subr.mxu0 0.0
    %711 = vmatpush1.xpose.msra.mxu0 0.0
    %712 = vmatprep.subr.mxu0 0.0
    %713 = vmatpush1.xpose.msra.mxu0 0.0
    %714 = vmatprep.subr.mxu0 0.0
    %715 = vmatpush1.xpose.msra.mxu0 0.0
    %716 = vmatprep.subr.mxu0 0.0
    %717 = vmatpush1.xpose.msra.mxu0 0.0
    %718 = vmatprep.subr.mxu0 0.0
    %719 = vmatpush1.xpose.msra.mxu0 0.0
    %720 = vmatprep.subr.mxu0 0.0
    %721 = vmatpush1.xpose.msra.mxu0 0.0
    %722 = vmatprep.subr.mxu0 0.0
    %723 = vmatpush1.xpose.msra.mxu0 0.0
    %724 = vmatprep.subr.mxu0 0.0
    %725 = vmatpush1.xpose.msra.mxu0 0.0
    %726 = vmatprep.subr.mxu0 0.0
    %727 = vmatpush1.xpose.msra.mxu0 0.0
    %728 = vmatprep.subr.mxu0 0.0
    %729 = vmatpush1.xpose.msra.mxu0 0.0
    %730 = vmatprep.subr.mxu0 0.0
    %731 = vmatpush1.xpose.msra.mxu0 0.0
    %732 = vmatprep.subr.mxu0 0.0
    %733 = vmatpush1.xpose.msra.mxu0 0.0
    %734 = vmatprep.subr.mxu0 0.0
    %735 = vmatpush1.xpose.msra.mxu0 0.0
    %736 = vmatprep.mubr.f32.mxu0 0.0
    %737 = vmatmul.mubr.f32.gmra.mrb[0].mxu0 %v156
    %v738 = vpop.f32.mrb[0].mxu0
    %v739 = vadd.f32 %v152, %v738
    %v740 = vpop.f32.mrb[0].mxu0
    %741 = vdwg.mxu0
    %v742 = vld [vmem:[#allocation2] sm:$0x1]
    %s743 = vtos %v742
    %v744 = vstv %s743
    %v745 = vadd.f32 %v228, %v744
    %v746 = vadd.f32 %v301, %v744
    %v747 = vadd.f32 %v374, %v744
    %v748 = vadd.f32 %v447, %v744
    %v749 = vadd.f32 %v520, %v744
    %v750 = vadd.f32 %v593, %v744
    %v751 = vadd.f32 %v666, %v744
    %v752 = vadd.f32 %v739, %v744
    %v753 = vsub.f32 1.0, %v103
    %v754 = vsub.f32 1.0, %v104
    %v755 = vsub.f32 1.0, %v105
    %v756 = vsub.f32 1.0, %v106
    %v757 = vsub.f32 1.0, %v107
    %v758 = vsub.f32 1.0, %v108
    %v759 = vsub.f32 1.0, %v109
    %v760 = vsub.f32 1.0, %v110
    %v761 = vmul.f32 %v753, 1e+30
    %v762 = vmul.f32 %v754, 1e+30
    %v763 = vmul.f32 %v755, 1e+30
    %v764 = vmul.f32 %v756, 1e+30
    %v765 = vmul.f32 %v757, 1e+30
    %v766 = vmul.f32 %v758, 1e+30
    %v767 = vmul.f32 %v759, 1e+30
    %v768 = vmul.f32 %v760, 1e+30
    %v769 = vsub.f32 %v745, %v761
    %v770 = vsub.f32 %v746, %v762
    %v771 = vsub.f32 %v747, %v763
    %v772 = vsub.f32 %v748, %v764
    %v773 = vsub.f32 %v749, %v765
    %v774 = vsub.f32 %v750, %v766
    %v775 = vsub.f32 %v751, %v767
    %v776 = vsub.f32 %v752, %v768
    %vm777 = vcmask 57344
    %v778 = vsel %vm777, %v769, -inf
    %779 = vmax.xlane.f32.xlu0 %v778
    %v780 = vpop.xlane.xlu0 %779
    %v781 = vsel %vm777, %v770, -inf
    %782 = vmax.xlane.f32.xlu0 %v781
    %v783 = vpop.xlane.xlu0 %782
    %v784 = vsel %vm777, %v771, -inf
    %785 = vmax.xlane.f32.xlu0 %v784
    %v786 = vpop.xlane.xlu0 %785
    %v787 = vsel %vm777, %v772, -inf
    %788 = vmax.xlane.f32.xlu0 %v787
    %v789 = vpop.xlane.xlu0 %788
    %v790 = vsel %vm777, %v773, -inf
    %791 = vmax.xlane.f32.xlu0 %v790
    %v792 = vpop.xlane.xlu0 %791
    %v793 = vsel %vm777, %v774, -inf
    %794 = vmax.xlane.f32.xlu0 %v793
    %v795 = vpop.xlane.xlu0 %794
    %v796 = vsel %vm777, %v775, -inf
    %797 = vmax.xlane.f32.xlu0 %v796
    %v798 = vpop.xlane.xlu0 %797
    %v799 = vsel %vm777, %v776, -inf
    %800 = vmax.xlane.f32.xlu0 %v799
    %v801 = vpop.xlane.xlu0 %800
    %v802 = vsub.f32 %v769, %v780
    %v803 = vsub.f32 %v770, %v783
    %v804 = vsub.f32 %v771, %v786
    %v805 = vsub.f32 %v772, %v789
    %v806 = vsub.f32 %v773, %v792
    %v807 = vsub.f32 %v774, %v795
    %v808 = vsub.f32 %v775, %v798
    %v809 = vsub.f32 %v776, %v801
    %v810 = vmul.f32 %v802, 1.442695
    %v811 = vpow.pop %v810
    %v812 = vmul.f32 %v803, 1.442695
    %v813 = vpow.pop %v812
    %v814 = vmul.f32 %v804, 1.442695
    %v815 = vpow.pop %v814
    %v816 = vmul.f32 %v805, 1.442695
    %v817 = vpow.pop %v816
    %v818 = vmul.f32 %v806, 1.442695
    %v819 = vpow.pop %v818
    %v820 = vmul.f32 %v807, 1.442695
    %v821 = vpow.pop %v820
    %v822 = vmul.f32 %v808, 1.442695
    %v823 = vpow.pop %v822
    %v824 = vmul.f32 %v809, 1.442695
    %v825 = vpow.pop %v824
    %v826 = vsel %vm777, %v811, 0.0
    %827 = vadd.xlane.f32.xlu0 %v826
    %v828 = vpop.xlane.xlu0 %827
    %v829 = vsel %vm777, %v813, 0.0
    %830 = vadd.xlane.f32.xlu0 %v829
    %v831 = vpop.xlane.xlu0 %830
    %v832 = vsel %vm777, %v815, 0.0
    %833 = vadd.xlane.f32.xlu0 %v832
    %v834 = vpop.xlane.xlu0 %833
    %v835 = vsel %vm777, %v817, 0.0
    %836 = vadd.xlane.f32.xlu0 %v835
    %v837 = vpop.xlane.xlu0 %836
    %v838 = vsel %vm777, %v819, 0.0
    %839 = vadd.xlane.f32.xlu0 %v838
    %v840 = vpop.xlane.xlu0 %839
    %v841 = vsel %vm777, %v821, 0.0
    %842 = vadd.xlane.f32.xlu0 %v841
    %v843 = vpop.xlane.xlu0 %842
    %v844 = vsel %vm777, %v823, 0.0
    %845 = vadd.xlane.f32.xlu0 %v844
    %v846 = vpop.xlane.xlu0 %845
    %v847 = vsel %vm777, %v825, 0.0
    %848 = vadd.xlane.f32.xlu0 %v847
    %v849 = vpop.xlane.xlu0 %848
    %v850 = vrcp.pop %v828
    %v851 = vmul.f32 %v811, %v850
    %v852 = vrcp.pop %v831
    %v853 = vmul.f32 %v813, %v852
    %v854 = vrcp.pop %v834
    %v855 = vmul.f32 %v815, %v854
    %v856 = vrcp.pop %v837
    %v857 = vmul.f32 %v817, %v856
    %v858 = vrcp.pop %v840
    %v859 = vmul.f32 %v819, %v858
    %v860 = vrcp.pop %v843
    %v861 = vmul.f32 %v821, %v860
    %v862 = vrcp.pop %v846
    %v863 = vmul.f32 %v823, %v862
    %v864 = vrcp.pop %v849
    %v865 = vmul.f32 %v825, %v864
    %866 = vst.msk [vmem:[#allocation9] sm:$0x1] %vm777, %v851
    %867 = vst.msk [vmem:[#allocation9 + $0x1] sm:$0x1] %vm777, %v853
    %868 = vst.msk [vmem:[#allocation9 + $0x2] sm:$0x1] %vm777, %v855
    %869 = vst.msk [vmem:[#allocation9 + $0x3] sm:$0x1] %vm777, %v857
    %870 = vst.msk [vmem:[#allocation9 + $0x4] sm:$0x1] %vm777, %v859
    %871 = vst.msk [vmem:[#allocation9 + $0x5] sm:$0x1] %vm777, %v861
    %872 = vst.msk [vmem:[#allocation9 + $0x6] sm:$0x1] %vm777, %v863
    %873 = vst.msk [vmem:[#allocation9 + $0x7] sm:$0x1] %vm777, %v865
    %v874 = vld [vmem:[%s8] sm:$0xff]
    %v875 = vld [vmem:[%s8 + $0x8] sm:$0xff]
    %v876 = vld [vmem:[%s8 + $0x10] sm:$0xff]
    %v877 = vld [vmem:[%s8 + $0x18] sm:$0xff]
    %v879 = vsel %vm154, %v95, 0
    %881 = vmatprep.subr.mxu0 0.0
    %882 = vmatpush1.msra.mxu0 %v874
    %883 = vmatprep.subr.mxu0 0.0
    %884 = vmatpush1.msra.mxu0 %v875
    %885 = vmatprep.subr.mxu0 0.0
    %886 = vmatpush1.msra.mxu0 %v876
    %887 = vmatprep.subr.mxu0 0.0
    %888 = vmatpush1.msra.mxu0 %v877
    %889 = vmatprep.subr.mxu0 0.0
    %890 = vmatpush1.msra.mxu0 0.0
    %891 = vmatprep.subr.mxu0 0.0
    %892 = vmatpush1.msra.mxu0 0.0
    %893 = vmatprep.subr.mxu0 0.0
    %894 = vmatpush1.msra.mxu0 0.0
    %895 = vmatprep.subr.mxu0 0.0
    %896 = vmatpush1.msra.mxu0 0.0
    %897 = vmatprep.subr.mxu0 0.0
    %898 = vmatpush1.msra.mxu0 0.0
    %899 = vmatprep.subr.mxu0 0.0
    %900 = vmatpush1.msra.mxu0 0.0
    %901 = vmatprep.subr.mxu0 0.0
    %902 = vmatpush1.msra.mxu0 0.0
    %903 = vmatprep.subr.mxu0 0.0
    %904 = vmatpush1.msra.mxu0 0.0
    %905 = vmatprep.subr.mxu0 0.0
    %906 = vmatpush1.msra.mxu0 0.0
    %907 = vmatprep.subr.mxu0 0.0
    %908 = vmatpush1.msra.mxu0 0.0
    %909 = vmatprep.subr.mxu0 0.0
    %910 = vmatpush1.msra.mxu0 0.0
    %911 = vmatprep.subr.mxu0 0.0
    %912 = vmatpush1.msra.mxu0 0.0
    %913 = vmatprep.subr.mxu0 0.0
    %914 = vmatpush1.msra.mxu0 0.0
    %915 = vmatprep.subr.mxu0 0.0
    %916 = vmatpush1.msra.mxu0 0.0
    %917 = vmatprep.subr.mxu0 0.0
    %918 = vmatpush1.msra.mxu0 0.0
    %919 = vmatprep.subr.mxu0 0.0
    %920 = vmatpush1.msra.mxu0 0.0
    %921 = vmatprep.subr.mxu0 0.0
    %922 = vmatpush1.msra.mxu0 0.0
    %923 = vmatprep.subr.mxu0 0.0
    %924 = vmatpush1.msra.mxu0 0.0
    %925 = vmatprep.subr.mxu0 0.0
    %926 = vmatpush1.msra.mxu0 0.0
    %927 = vmatprep.subr.mxu0 0.0
    %928 = vmatpush1.msra.mxu0 0.0
    %929 = vmatprep.subr.mxu0 0.0
    %930 = vmatpush1.msra.mxu0 0.0
    %931 = vmatprep.subr.mxu0 0.0
    %932 = vmatpush1.msra.mxu0 0.0
    %933 = vmatprep.subr.mxu0 0.0
    %934 = vmatpush1.msra.mxu0 0.0
    %935 = vmatprep.subr.mxu0 0.0
    %936 = vmatpush1.msra.mxu0 0.0
    %937 = vmatprep.subr.mxu0 0.0
    %938 = vmatpush1.msra.mxu0 0.0
    %939 = vmatprep.subr.mxu0 0.0
    %940 = vmatpush1.msra.mxu0 0.0
    %941 = vmatprep.subr.mxu0 0.0
    %942 = vmatpush1.msra.mxu0 0.0
    %943 = vmatprep.subr.mxu0 0.0
    %944 = vmatpush1.msra.mxu0 0.0
    %945 = vmatprep.mubr.f32.mxu0 0.0
    %946 = vmatmul.mubr.f32.gmra.mrb[0].mxu0 %v879
    %v947 = vpop.f32.mrb[0].mxu0
    %v948 = vadd.f32 0.0, %v947
    %v949 = vpop.f32.mrb[0].mxu0
    %950 = vdwg.mxu0
    %v952 = vsel %vm154, %v96, 0
    %954 = vmatprep.subr.mxu0 0.0
    %955 = vmatpush1.msra.mxu0 %v874
    %956 = vmatprep.subr.mxu0 0.0
    %957 = vmatpush1.msra.mxu0 %v875
    %958 = vmatprep.subr.mxu0 0.0
    %959 = vmatpush1.msra.mxu0 %v876
    %960 = vmatprep.subr.mxu0 0.0
    %961 = vmatpush1.msra.mxu0 %v877
    %962 = vmatprep.subr.mxu0 0.0
    %963 = vmatpush1.msra.mxu0 0.0
    %964 = vmatprep.subr.mxu0 0.0
    %965 = vmatpush1.msra.mxu0 0.0
    %966 = vmatprep.subr.mxu0 0.0
    %967 = vmatpush1.msra.mxu0 0.0
    %968 = vmatprep.subr.mxu0 0.0
    %969 = vmatpush1.msra.mxu0 0.0
    %970 = vmatprep.subr.mxu0 0.0
    %971 = vmatpush1.msra.mxu0 0.0
    %972 = vmatprep.subr.mxu0 0.0
    %973 = vmatpush1.msra.mxu0 0.0
    %974 = vmatprep.subr.mxu0 0.0
    %975 = vmatpush1.msra.mxu0 0.0
    %976 = vmatprep.subr.mxu0 0.0
    %977 = vmatpush1.msra.mxu0 0.0
    %978 = vmatprep.subr.mxu0 0.0
    %979 = vmatpush1.msra.mxu0 0.0
    %980 = vmatprep.subr.mxu0 0.0
    %981 = vmatpush1.msra.mxu0 0.0
    %982 = vmatprep.subr.mxu0 0.0
    %983 = vmatpush1.msra.mxu0 0.0
    %984 = vmatprep.subr.mxu0 0.0
    %985 = vmatpush1.msra.mxu0 0.0
    %986 = vmatprep.subr.mxu0 0.0
    %987 = vmatpush1.msra.mxu0 0.0
    %988 = vmatprep.subr.mxu0 0.0
    %989 = vmatpush1.msra.mxu0 0.0
    %990 = vmatprep.subr.mxu0 0.0
    %991 = vmatpush1.msra.mxu0 0.0
    %992 = vmatprep.subr.mxu0 0.0
    %993 = vmatpush1.msra.mxu0 0.0
    %994 = vmatprep.subr.mxu0 0.0
    %995 = vmatpush1.msra.mxu0 0.0
    %996 = vmatprep.subr.mxu0 0.0
    %997 = vmatpush1.msra.mxu0 0.0
    %998 = vmatprep.subr.mxu0 0.0
    %999 = vmatpush1.msra.mxu0 0.0
    %1000 = vmatprep.subr.mxu0 0.0
    %1001 = vmatpush1.msra.mxu0 0.0
    %1002 = vmatprep.subr.mxu0 0.0
    %1003 = vmatpush1.msra.mxu0 0.0
    %1004 = vmatprep.subr.mxu0 0.0
    %1005 = vmatpush1.msra.mxu0 0.0
    %1006 = vmatprep.subr.mxu0 0.0
    %1007 = vmatpush1.msra.mxu0 0.0
    %1008 = vmatprep.subr.mxu0 0.0
    %1009 = vmatpush1.msra.mxu0 0.0
    %1010 = vmatprep.subr.mxu0 0.0
    %1011 = vmatpush1.msra.mxu0 0.0
    %1012 = vmatprep.subr.mxu0 0.0
    %1013 = vmatpush1.msra.mxu0 0.0
    %1014 = vmatprep.subr.mxu0 0.0
    %1015 = vmatpush1.msra.mxu0 0.0
    %1016 = vmatprep.subr.mxu0 0.0
    %1017 = vmatpush1.msra.mxu0 0.0
    %1018 = vmatprep.mubr.f32.mxu0 0.0
    %1019 = vmatmul.mubr.f32.gmra.mrb[0].mxu0 %v952
    %v1020 = vpop.f32.mrb[0].mxu0
    %v1021 = vadd.f32 0.0, %v1020
    %v1022 = vpop.f32.mrb[0].mxu0
    %1023 = vdwg.mxu0
    %v1025 = vsel %vm154, %v97, 0
    %1027 = vmatprep.subr.mxu0 0.0
    %1028 = vmatpush1.msra.mxu0 %v874
    %1029 = vmatprep.subr.mxu0 0.0
    %1030 = vmatpush1.msra.mxu0 %v875
    %1031 = vmatprep.subr.mxu0 0.0
    %1032 = vmatpush1.msra.mxu0 %v876
    %1033 = vmatprep.subr.mxu0 0.0
    %1034 = vmatpush1.msra.mxu0 %v877
    %1035 = vmatprep.subr.mxu0 0.0
    %1036 = vmatpush1.msra.mxu0 0.0
    %1037 = vmatprep.subr.mxu0 0.0
    %1038 = vmatpush1.msra.mxu0 0.0
    %1039 = vmatprep.subr.mxu0 0.0
    %1040 = vmatpush1.msra.mxu0 0.0
    %1041 = vmatprep.subr.mxu0 0.0
    %1042 = vmatpush1.msra.mxu0 0.0
    %1043 = vmatprep.subr.mxu0 0.0
    %1044 = vmatpush1.msra.mxu0 0.0
    %1045 = vmatprep.subr.mxu0 0.0
    %1046 = vmatpush1.msra.mxu0 0.0
    %1047 = vmatprep.subr.mxu0 0.0
    %1048 = vmatpush1.msra.mxu0 0.0
    %1049 = vmatprep.subr.mxu0 0.0
    %1050 = vmatpush1.msra.mxu0 0.0
    %1051 = vmatprep.subr.mxu0 0.0
    %1052 = vmatpush1.msra.mxu0 0.0
    %1053 = vmatprep.subr.mxu0 0.0
    %1054 = vmatpush1.msra.mxu0 0.0
    %1055 = vmatprep.subr.mxu0 0.0
    %1056 = vmatpush1.msra.mxu0 0.0
    %1057 = vmatprep.subr.mxu0 0.0
    %1058 = vmatpush1.msra.mxu0 0.0
    %1059 = vmatprep.subr.mxu0 0.0
    %1060 = vmatpush1.msra.mxu0 0.0
    %1061 = vmatprep.subr.mxu0 0.0
    %1062 = vmatpush1.msra.mxu0 0.0
    %1063 = vmatprep.subr.mxu0 0.0
    %1064 = vmatpush1.msra.mxu0 0.0
    %1065 = vmatprep.subr.mxu0 0.0
    %1066 = vmatpush1.msra.mxu0 0.0
    %1067 = vmatprep.subr.mxu0 0.0
    %1068 = vmatpush1.msra.mxu0 0.0
    %1069 = vmatprep.subr.mxu0 0.0
    %1070 = vmatpush1.msra.mxu0 0.0
    %1071 = vmatprep.subr.mxu0 0.0
    %1072 = vmatpush1.msra.mxu0 0.0
    %1073 = vmatprep.subr.mxu0 0.0
    %1074 = vmatpush1.msra.mxu0 0.0
    %1075 = vmatprep.subr.mxu0 0.0
    %1076 = vmatpush1.msra.mxu0 0.0
    %1077 = vmatprep.subr.mxu0 0.0
    %1078 = vmatpush1.msra.mxu0 0.0
    %1079 = vmatprep.subr.mxu0 0.0
    %1080 = vmatpush1.msra.mxu0 0.0
    %1081 = vmatprep.subr.mxu0 0.0
    %1082 = vmatpush1.msra.mxu0 0.0
    %1083 = vmatprep.subr.mxu0 0.0
    %1084 = vmatpush1.msra.mxu0 0.0
    %1085 = vmatprep.subr.mxu0 0.0
    %1086 = vmatpush1.msra.mxu0 0.0
    %1087 = vmatprep.subr.mxu0 0.0
    %1088 = vmatpush1.msra.mxu0 0.0
    %1089 = vmatprep.subr.mxu0 0.0
    %1090 = vmatpush1.msra.mxu0 0.0
    %1091 = vmatprep.mubr.f32.mxu0 0.0
    %1092 = vmatmul.mubr.f32.gmra.mrb[0].mxu0 %v1025
    %v1093 = vpop.f32.mrb[0].mxu0
    %v1094 = vadd.f32 0.0, %v1093
    %v1095 = vpop.f32.mrb[0].mxu0
    %1096 = vdwg.mxu0
    %v1098 = vsel %vm154, %v98, 0
    %1100 = vmatprep.subr.mxu0 0.0
    %1101 = vmatpush1.msra.mxu0 %v874
    %1102 = vmatprep.subr.mxu0 0.0
    %1103 = vmatpush1.msra.mxu0 %v875
    %1104 = vmatprep.subr.mxu0 0.0
    %1105 = vmatpush1.msra.mxu0 %v876
    %1106 = vmatprep.subr.mxu0 0.0
    %1107 = vmatpush1.msra.mxu0 %v877
    %1108 = vmatprep.subr.mxu0 0.0
    %1109 = vmatpush1.msra.mxu0 0.0
    %1110 = vmatprep.subr.mxu0 0.0
    %1111 = vmatpush1.msra.mxu0 0.0
    %1112 = vmatprep.subr.mxu0 0.0
    %1113 = vmatpush1.msra.mxu0 0.0
    %1114 = vmatprep.subr.mxu0 0.0
    %1115 = vmatpush1.msra.mxu0 0.0
    %1116 = vmatprep.subr.mxu0 0.0
    %1117 = vmatpush1.msra.mxu0 0.0
    %1118 = vmatprep.subr.mxu0 0.0
    %1119 = vmatpush1.msra.mxu0 0.0
    %1120 = vmatprep.subr.mxu0 0.0
    %1121 = vmatpush1.msra.mxu0 0.0
    %1122 = vmatprep.subr.mxu0 0.0
    %1123 = vmatpush1.msra.mxu0 0.0
    %1124 = vmatprep.subr.mxu0 0.0
    %1125 = vmatpush1.msra.mxu0 0.0
    %1126 = vmatprep.subr.mxu0 0.0
    %1127 = vmatpush1.msra.mxu0 0.0
    %1128 = vmatprep.subr.mxu0 0.0
    %1129 = vmatpush1.msra.mxu0 0.0
    %1130 = vmatprep.subr.mxu0 0.0
    %1131 = vmatpush1.msra.mxu0 0.0
    %1132 = vmatprep.subr.mxu0 0.0
    %1133 = vmatpush1.msra.mxu0 0.0
    %1134 = vmatprep.subr.mxu0 0.0
    %1135 = vmatpush1.msra.mxu0 0.0
    %1136 = vmatprep.subr.mxu0 0.0
    %1137 = vmatpush1.msra.mxu0 0.0
    %1138 = vmatprep.subr.mxu0 0.0
    %1139 = vmatpush1.msra.mxu0 0.0
    %1140 = vmatprep.subr.mxu0 0.0
    %1141 = vmatpush1.msra.mxu0 0.0
    %1142 = vmatprep.subr.mxu0 0.0
    %1143 = vmatpush1.msra.mxu0 0.0
    %1144 = vmatprep.subr.mxu0 0.0
    %1145 = vmatpush1.msra.mxu0 0.0
    %1146 = vmatprep.subr.mxu0 0.0
    %1147 = vmatpush1.msra.mxu0 0.0
    %1148 = vmatprep.subr.mxu0 0.0
    %1149 = vmatpush1.msra.mxu0 0.0
    %1150 = vmatprep.subr.mxu0 0.0
    %1151 = vmatpush1.msra.mxu0 0.0
    %1152 = vmatprep.subr.mxu0 0.0
    %1153 = vmatpush1.msra.mxu0 0.0
    %1154 = vmatprep.subr.mxu0 0.0
    %1155 = vmatpush1.msra.mxu0 0.0
    %1156 = vmatprep.subr.mxu0 0.0
    %1157 = vmatpush1.msra.mxu0 0.0
    %1158 = vmatprep.subr.mxu0 0.0
    %1159 = vmatpush1.msra.mxu0 0.0
    %1160 = vmatprep.subr.mxu0 0.0
    %1161 = vmatpush1.msra.mxu0 0.0
    %1162 = vmatprep.subr.mxu0 0.0
    %1163 = vmatpush1.msra.mxu0 0.0
    %1164 = vmatprep.mubr.f32.mxu0 0.0
    %1165 = vmatmul.mubr.f32.gmra.mrb[0].mxu0 %v1098
    %v1166 = vpop.f32.mrb[0].mxu0
    %v1167 = vadd.f32 0.0, %v1166
    %v1168 = vpop.f32.mrb[0].mxu0
    %1169 = vdwg.mxu0
    %v1171 = vsel %vm154, %v99, 0
    %1173 = vmatprep.subr.mxu0 0.0
    %1174 = vmatpush1.msra.mxu0 %v874
    %1175 = vmatprep.subr.mxu0 0.0
    %1176 = vmatpush1.msra.mxu0 %v875
    %1177 = vmatprep.subr.mxu0 0.0
    %1178 = vmatpush1.msra.mxu0 %v876
    %1179 = vmatprep.subr.mxu0 0.0
    %1180 = vmatpush1.msra.mxu0 %v877
    %1181 = vmatprep.subr.mxu0 0.0
    %1182 = vmatpush1.msra.mxu0 0.0
    %1183 = vmatprep.subr.mxu0 0.0
    %1184 = vmatpush1.msra.mxu0 0.0
    %1185 = vmatprep.subr.mxu0 0.0
    %1186 = vmatpush1.msra.mxu0 0.0
    %1187 = vmatprep.subr.mxu0 0.0
    %1188 = vmatpush1.msra.mxu0 0.0
    %1189 = vmatprep.subr.mxu0 0.0
    %1190 = vmatpush1.msra.mxu0 0.0
    %1191 = vmatprep.subr.mxu0 0.0
    %1192 = vmatpush1.msra.mxu0 0.0
    %1193 = vmatprep.subr.mxu0 0.0
    %1194 = vmatpush1.msra.mxu0 0.0
    %1195 = vmatprep.subr.mxu0 0.0
    %1196 = vmatpush1.msra.mxu0 0.0
    %1197 = vmatprep.subr.mxu0 0.0
    %1198 = vmatpush1.msra.mxu0 0.0
    %1199 = vmatprep.subr.mxu0 0.0
    %1200 = vmatpush1.msra.mxu0 0.0
    %1201 = vmatprep.subr.mxu0 0.0
    %1202 = vmatpush1.msra.mxu0 0.0
    %1203 = vmatprep.subr.mxu0 0.0
    %1204 = vmatpush1.msra.mxu0 0.0
    %1205 = vmatprep.subr.mxu0 0.0
    %1206 = vmatpush1.msra.mxu0 0.0
    %1207 = vmatprep.subr.mxu0 0.0
    %1208 = vmatpush1.msra.mxu0 0.0
    %1209 = vmatprep.subr.mxu0 0.0
    %1210 = vmatpush1.msra.mxu0 0.0
    %1211 = vmatprep.subr.mxu0 0.0
    %1212 = vmatpush1.msra.mxu0 0.0
    %1213 = vmatprep.subr.mxu0 0.0
    %1214 = vmatpush1.msra.mxu0 0.0
    %1215 = vmatprep.subr.mxu0 0.0
    %1216 = vmatpush1.msra.mxu0 0.0
    %1217 = vmatprep.subr.mxu0 0.0
    %1218 = vmatpush1.msra.mxu0 0.0
    %1219 = vmatprep.subr.mxu0 0.0
    %1220 = vmatpush1.msra.mxu0 0.0
    %1221 = vmatprep.subr.mxu0 0.0
    %1222 = vmatpush1.msra.mxu0 0.0
    %1223 = vmatprep.subr.mxu0 0.0
    %1224 = vmatpush1.msra.mxu0 0.0
    %1225 = vmatprep.subr.mxu0 0.0
    %1226 = vmatpush1.msra.mxu0 0.0
    %1227 = vmatprep.subr.mxu0 0.0
    %1228 = vmatpush1.msra.mxu0 0.0
    %1229 = vmatprep.subr.mxu0 0.0
    %1230 = vmatpush1.msra.mxu0 0.0
    %1231 = vmatprep.subr.mxu0 0.0
    %1232 = vmatpush1.msra.mxu0 0.0
    %1233 = vmatprep.subr.mxu0 0.0
    %1234 = vmatpush1.msra.mxu0 0.0
    %1235 = vmatprep.subr.mxu0 0.0
    %1236 = vmatpush1.msra.mxu0 0.0
    %1237 = vmatprep.mubr.f32.mxu0 0.0
    %1238 = vmatmul.mubr.f32.gmra.mrb[0].mxu0 %v1171
    %v1239 = vpop.f32.mrb[0].mxu0
    %v1240 = vadd.f32 0.0, %v1239
    %v1241 = vpop.f32.mrb[0].mxu0
    %1242 = vdwg.mxu0
    %v1244 = vsel %vm154, %v100, 0
    %1246 = vmatprep.subr.mxu0 0.0
    %1247 = vmatpush1.msra.mxu0 %v874
    %1248 = vmatprep.subr.mxu0 0.0
    %1249 = vmatpush1.msra.mxu0 %v875
    %1250 = vmatprep.subr.mxu0 0.0
    %1251 = vmatpush1.msra.mxu0 %v876
    %1252 = vmatprep.subr.mxu0 0.0
    %1253 = vmatpush1.msra.mxu0 %v877
    %1254 = vmatprep.subr.mxu0 0.0
    %1255 = vmatpush1.msra.mxu0 0.0
    %1256 = vmatprep.subr.mxu0 0.0
    %1257 = vmatpush1.msra.mxu0 0.0
    %1258 = vmatprep.subr.mxu0 0.0
    %1259 = vmatpush1.msra.mxu0 0.0
    %1260 = vmatprep.subr.mxu0 0.0
    %1261 = vmatpush1.msra.mxu0 0.0
    %1262 = vmatprep.subr.mxu0 0.0
    %1263 = vmatpush1.msra.mxu0 0.0
    %1264 = vmatprep.subr.mxu0 0.0
    %1265 = vmatpush1.msra.mxu0 0.0
    %1266 = vmatprep.subr.mxu0 0.0
    %1267 = vmatpush1.msra.mxu0 0.0
    %1268 = vmatprep.subr.mxu0 0.0
    %1269 = vmatpush1.msra.mxu0 0.0
    %1270 = vmatprep.subr.mxu0 0.0
    %1271 = vmatpush1.msra.mxu0 0.0
    %1272 = vmatprep.subr.mxu0 0.0
    %1273 = vmatpush1.msra.mxu0 0.0
    %1274 = vmatprep.subr.mxu0 0.0
    %1275 = vmatpush1.msra.mxu0 0.0
    %1276 = vmatprep.subr.mxu0 0.0
    %1277 = vmatpush1.msra.mxu0 0.0
    %1278 = vmatprep.subr.mxu0 0.0
    %1279 = vmatpush1.msra.mxu0 0.0
    %1280 = vmatprep.subr.mxu0 0.0
    %1281 = vmatpush1.msra.mxu0 0.0
    %1282 = vmatprep.subr.mxu0 0.0
    %1283 = vmatpush1.msra.mxu0 0.0
    %1284 = vmatprep.subr.mxu0 0.0
    %1285 = vmatpush1.msra.mxu0 0.0
    %1286 = vmatprep.subr.mxu0 0.0
    %1287 = vmatpush1.msra.mxu0 0.0
    %1288 = vmatprep.subr.mxu0 0.0
    %1289 = vmatpush1.msra.mxu0 0.0
    %1290 = vmatprep.subr.mxu0 0.0
    %1291 = vmatpush1.msra.mxu0 0.0
    %1292 = vmatprep.subr.mxu0 0.0
    %1293 = vmatpush1.msra.mxu0 0.0
    %1294 = vmatprep.subr.mxu0 0.0
    %1295 = vmatpush1.msra.mxu0 0.0
    %1296 = vmatprep.subr.mxu0 0.0
    %1297 = vmatpush1.msra.mxu0 0.0
    %1298 = vmatprep.subr.mxu0 0.0
    %1299 = vmatpush1.msra.mxu0 0.0
    %1300 = vmatprep.subr.mxu0 0.0
    %1301 = vmatpush1.msra.mxu0 0.0
    %1302 = vmatprep.subr.mxu0 0.0
    %1303 = vmatpush1.msra.mxu0 0.0
    %1304 = vmatprep.subr.mxu0 0.0
    %1305 = vmatpush1.msra.mxu0 0.0
    %1306 = vmatprep.subr.mxu0 0.0
    %1307 = vmatpush1.msra.mxu0 0.0
    %1308 = vmatprep.subr.mxu0 0.0
    %1309 = vmatpush1.msra.mxu0 0.0
    %1310 = vmatprep.mubr.f32.mxu0 0.0
    %1311 = vmatmul.mubr.f32.gmra.mrb[0].mxu0 %v1244
    %v1312 = vpop.f32.mrb[0].mxu0
    %v1313 = vadd.f32 0.0, %v1312
    %v1314 = vpop.f32.mrb[0].mxu0
    %1315 = vdwg.mxu0
    %v1317 = vsel %vm154, %v101, 0
    %1319 = vmatprep.subr.mxu0 0.0
    %1320 = vmatpush1.msra.mxu0 %v874
    %1321 = vmatprep.subr.mxu0 0.0
    %1322 = vmatpush1.msra.mxu0 %v875
    %1323 = vmatprep.subr.mxu0 0.0
    %1324 = vmatpush1.msra.mxu0 %v876
    %1325 = vmatprep.subr.mxu0 0.0
    %1326 = vmatpush1.msra.mxu0 %v877
    %1327 = vmatprep.subr.mxu0 0.0
    %1328 = vmatpush1.msra.mxu0 0.0
    %1329 = vmatprep.subr.mxu0 0.0
    %1330 = vmatpush1.msra.mxu0 0.0
    %1331 = vmatprep.subr.mxu0 0.0
    %1332 = vmatpush1.msra.mxu0 0.0
    %1333 = vmatprep.subr.mxu0 0.0
    %1334 = vmatpush1.msra.mxu0 0.0
    %1335 = vmatprep.subr.mxu0 0.0
    %1336 = vmatpush1.msra.mxu0 0.0
    %1337 = vmatprep.subr.mxu0 0.0
    %1338 = vmatpush1.msra.mxu0 0.0
    %1339 = vmatprep.subr.mxu0 0.0
    %1340 = vmatpush1.msra.mxu0 0.0
    %1341 = vmatprep.subr.mxu0 0.0
    %1342 = vmatpush1.msra.mxu0 0.0
    %1343 = vmatprep.subr.mxu0 0.0
    %1344 = vmatpush1.msra.mxu0 0.0
    %1345 = vmatprep.subr.mxu0 0.0
    %1346 = vmatpush1.msra.mxu0 0.0
    %1347 = vmatprep.subr.mxu0 0.0
    %1348 = vmatpush1.msra.mxu0 0.0
    %1349 = vmatprep.subr.mxu0 0.0
    %1350 = vmatpush1.msra.mxu0 0.0
    %1351 = vmatprep.subr.mxu0 0.0
    %1352 = vmatpush1.msra.mxu0 0.0
    %1353 = vmatprep.subr.mxu0 0.0
    %1354 = vmatpush1.msra.mxu0 0.0
    %1355 = vmatprep.subr.mxu0 0.0
    %1356 = vmatpush1.msra.mxu0 0.0
    %1357 = vmatprep.subr.mxu0 0.0
    %1358 = vmatpush1.msra.mxu0 0.0
    %1359 = vmatprep.subr.mxu0 0.0
    %1360 = vmatpush1.msra.mxu0 0.0
    %1361 = vmatprep.subr.mxu0 0.0
    %1362 = vmatpush1.msra.mxu0 0.0
    %1363 = vmatprep.subr.mxu0 0.0
    %1364 = vmatpush1.msra.mxu0 0.0
    %1365 = vmatprep.subr.mxu0 0.0
    %1366 = vmatpush1.msra.mxu0 0.0
    %1367 = vmatprep.subr.mxu0 0.0
    %1368 = vmatpush1.msra.mxu0 0.0
    %1369 = vmatprep.subr.mxu0 0.0
    %1370 = vmatpush1.msra.mxu0 0.0
    %1371 = vmatprep.subr.mxu0 0.0
    %1372 = vmatpush1.msra.mxu0 0.0
    %1373 = vmatprep.subr.mxu0 0.0
    %1374 = vmatpush1.msra.mxu0 0.0
    %1375 = vmatprep.subr.mxu0 0.0
    %1376 = vmatpush1.msra.mxu0 0.0
    %1377 = vmatprep.subr.mxu0 0.0
    %1378 = vmatpush1.msra.mxu0 0.0
    %1379 = vmatprep.subr.mxu0 0.0
    %1380 = vmatpush1.msra.mxu0 0.0
    %1381 = vmatprep.subr.mxu0 0.0
    %1382 = vmatpush1.msra.mxu0 0.0
    %1383 = vmatprep.mubr.f32.mxu0 0.0
    %1384 = vmatmul.mubr.f32.gmra.mrb[0].mxu0 %v1317
    %v1385 = vpop.f32.mrb[0].mxu0
    %v1386 = vadd.f32 0.0, %v1385
    %v1387 = vpop.f32.mrb[0].mxu0
    %1388 = vdwg.mxu0
    %v1390 = vsel %vm154, %v102, 0
    %1392 = vmatprep.subr.mxu0 0.0
    %1393 = vmatpush1.msra.mxu0 %v874
    %1394 = vmatprep.subr.mxu0 0.0
    %1395 = vmatpush1.msra.mxu0 %v875
    %1396 = vmatprep.subr.mxu0 0.0
    %1397 = vmatpush1.msra.mxu0 %v876
    %1398 = vmatprep.subr.mxu0 0.0
    %1399 = vmatpush1.msra.mxu0 %v877
    %1400 = vmatprep.subr.mxu0 0.0
    %1401 = vmatpush1.msra.mxu0 0.0
    %1402 = vmatprep.subr.mxu0 0.0
    %1403 = vmatpush1.msra.mxu0 0.0
    %1404 = vmatprep.subr.mxu0 0.0
    %1405 = vmatpush1.msra.mxu0 0.0
    %1406 = vmatprep.subr.mxu0 0.0
    %1407 = vmatpush1.msra.mxu0 0.0
    %1408 = vmatprep.subr.mxu0 0.0
    %1409 = vmatpush1.msra.mxu0 0.0
    %1410 = vmatprep.subr.mxu0 0.0
    %1411 = vmatpush1.msra.mxu0 0.0
    %1412 = vmatprep.subr.mxu0 0.0
    %1413 = vmatpush1.msra.mxu0 0.0
    %1414 = vmatprep.subr.mxu0 0.0
    %1415 = vmatpush1.msra.mxu0 0.0
    %1416 = vmatprep.subr.mxu0 0.0
    %1417 = vmatpush1.msra.mxu0 0.0
    %1418 = vmatprep.subr.mxu0 0.0
    %1419 = vmatpush1.msra.mxu0 0.0
    %1420 = vmatprep.subr.mxu0 0.0
    %1421 = vmatpush1.msra.mxu0 0.0
    %1422 = vmatprep.subr.mxu0 0.0
    %1423 = vmatpush1.msra.mxu0 0.0
    %1424 = vmatprep.subr.mxu0 0.0
    %1425 = vmatpush1.msra.mxu0 0.0
    %1426 = vmatprep.subr.mxu0 0.0
    %1427 = vmatpush1.msra.mxu0 0.0
    %1428 = vmatprep.subr.mxu0 0.0
    %1429 = vmatpush1.msra.mxu0 0.0
    %1430 = vmatprep.subr.mxu0 0.0
    %1431 = vmatpush1.msra.mxu0 0.0
    %1432 = vmatprep.subr.mxu0 0.0
    %1433 = vmatpush1.msra.mxu0 0.0
    %1434 = vmatprep.subr.mxu0 0.0
    %1435 = vmatpush1.msra.mxu0 0.0
    %1436 = vmatprep.subr.mxu0 0.0
    %1437 = vmatpush1.msra.mxu0 0.0
    %1438 = vmatprep.subr.mxu0 0.0
    %1439 = vmatpush1.msra.mxu0 0.0
    %1440 = vmatprep.subr.mxu0 0.0
    %1441 = vmatpush1.msra.mxu0 0.0
    %1442 = vmatprep.subr.mxu0 0.0
    %1443 = vmatpush1.msra.mxu0 0.0
    %1444 = vmatprep.subr.mxu0 0.0
    %1445 = vmatpush1.msra.mxu0 0.0
    %1446 = vmatprep.subr.mxu0 0.0
    %1447 = vmatpush1.msra.mxu0 0.0
    %1448 = vmatprep.subr.mxu0 0.0
    %1449 = vmatpush1.msra.mxu0 0.0
    %1450 = vmatprep.subr.mxu0 0.0
    %1451 = vmatpush1.msra.mxu0 0.0
    %1452 = vmatprep.subr.mxu0 0.0
    %1453 = vmatpush1.msra.mxu0 0.0
    %1454 = vmatprep.subr.mxu0 0.0
    %1455 = vmatpush1.msra.mxu0 0.0
    %1456 = vmatprep.mubr.f32.mxu0 0.0
    %1457 = vmatmul.mubr.f32.gmra.mrb[0].mxu0 %v1390
    %v1458 = vpop.f32.mrb[0].mxu0
    %v1459 = vadd.f32 0.0, %v1458
    %v1460 = vpop.f32.mrb[0].mxu0
    %1461 = vdwg.mxu0
    %1463 = vset.pattern.permute.xlu0 0
    %1464 = vperm.xlu0 %1463, %v111
    %v1465 = vpop.permute.xlu0 %1464
    %1468 = vset.pattern.permute.xlu0 0
    %1469 = vperm.xlu0 %1468, %v112
    %v1470 = vpop.permute.xlu0 %1469
    %1473 = vset.pattern.permute.xlu0 0
    %1474 = vperm.xlu0 %1473, %v113
    %v1475 = vpop.permute.xlu0 %1474
    %1478 = vset.pattern.permute.xlu0 0
    %1479 = vperm.xlu0 %1478, %v114
    %v1480 = vpop.permute.xlu0 %1479
    %1483 = vset.pattern.permute.xlu0 0
    %1484 = vperm.xlu0 %1483, %v115
    %v1485 = vpop.permute.xlu0 %1484
    %1488 = vset.pattern.permute.xlu0 0
    %1489 = vperm.xlu0 %1488, %v116
    %v1490 = vpop.permute.xlu0 %1489
    %1493 = vset.pattern.permute.xlu0 0
    %1494 = vperm.xlu0 %1493, %v117
    %v1495 = vpop.permute.xlu0 %1494
    %1498 = vset.pattern.permute.xlu0 0
    %1499 = vperm.xlu0 %1498, %v118
    %v1500 = vpop.permute.xlu0 %1499
    %v1502 = vmul.f32 %v948, %v1465
    %v1503 = vmul.f32 %v1021, %v1470
    %v1504 = vmul.f32 %v1094, %v1475
    %v1505 = vmul.f32 %v1167, %v1480
    %v1506 = vmul.f32 %v1240, %v1485
    %v1507 = vmul.f32 %v1313, %v1490
    %v1508 = vmul.f32 %v1386, %v1495
    %v1509 = vmul.f32 %v1459, %v1500
    %v1510 = vsub.f32 1.0, %v111
    %v1511 = vsub.f32 1.0, %v112
    %v1512 = vsub.f32 1.0, %v113
    %v1513 = vsub.f32 1.0, %v114
    %v1514 = vsub.f32 1.0, %v115
    %v1515 = vsub.f32 1.0, %v116
    %v1516 = vsub.f32 1.0, %v117
    %v1517 = vsub.f32 1.0, %v118
    %1519 = vset.pattern.permute.xlu0 0
    %1520 = vperm.xlu0 %1519, %v1510
    %v1521 = vpop.permute.xlu0 %1520
    %1524 = vset.pattern.permute.xlu0 0
    %1525 = vperm.xlu0 %1524, %v1511
    %v1526 = vpop.permute.xlu0 %1525
    %1529 = vset.pattern.permute.xlu0 0
    %1530 = vperm.xlu0 %1529, %v1512
    %v1531 = vpop.permute.xlu0 %1530
    %1534 = vset.pattern.permute.xlu0 0
    %1535 = vperm.xlu0 %1534, %v1513
    %v1536 = vpop.permute.xlu0 %1535
    %1539 = vset.pattern.permute.xlu0 0
    %1540 = vperm.xlu0 %1539, %v1514
    %v1541 = vpop.permute.xlu0 %1540
    %1544 = vset.pattern.permute.xlu0 0
    %1545 = vperm.xlu0 %1544, %v1515
    %v1546 = vpop.permute.xlu0 %1545
    %1549 = vset.pattern.permute.xlu0 0
    %1550 = vperm.xlu0 %1549, %v1516
    %v1551 = vpop.permute.xlu0 %1550
    %1554 = vset.pattern.permute.xlu0 0
    %1555 = vperm.xlu0 %1554, %v1517
    %v1556 = vpop.permute.xlu0 %1555
    %v1558 = vmul.f32 %v948, %v1521
    %v1559 = vmul.f32 %v1021, %v1526
    %v1560 = vmul.f32 %v1094, %v1531
    %v1561 = vmul.f32 %v1167, %v1536
    %v1562 = vmul.f32 %v1240, %v1541
    %v1563 = vmul.f32 %v1313, %v1546
    %v1564 = vmul.f32 %v1386, %v1551
    %v1565 = vmul.f32 %v1459, %v1556
    %1574 = vrot.lane.b32.xlu0 %v1558, 96
    %v1575 = vpop.permute.xlu0 %1574
    %1576 = vrot.lane.b32.xlu0 %v1559, 96
    %v1577 = vpop.permute.xlu0 %1576
    %1578 = vrot.lane.b32.xlu0 %v1560, 96
    %v1579 = vpop.permute.xlu0 %1578
    %1580 = vrot.lane.b32.xlu0 %v1561, 96
    %v1581 = vpop.permute.xlu0 %1580
    %1582 = vrot.lane.b32.xlu0 %v1562, 96
    %v1583 = vpop.permute.xlu0 %1582
    %1584 = vrot.lane.b32.xlu0 %v1563, 96
    %v1585 = vpop.permute.xlu0 %1584
    %1586 = vrot.lane.b32.xlu0 %v1564, 96
    %v1587 = vpop.permute.xlu0 %1586
    %1588 = vrot.lane.b32.xlu0 %v1565, 96
    %v1589 = vpop.permute.xlu0 %1588
    %v1598 = vadd.f32 %v1502, %v1575
    %v1599 = vadd.f32 %v1503, %v1577
    %v1600 = vadd.f32 %v1504, %v1579
    %v1601 = vadd.f32 %v1505, %v1581
    %v1602 = vadd.f32 %v1506, %v1583
    %v1603 = vadd.f32 %v1507, %v1585
    %v1604 = vadd.f32 %v1508, %v1587
    %v1605 = vadd.f32 %v1509, %v1589
    %vm1606 = vcmask 64512
    %v1608 = vsel %vm1606, %v851, 0
    %1610 = vmatprep.subr.mxu0 0.0
    %1611 = vmatpush1.msra.mxu0 %v1598
    %1612 = vmatprep.subr.mxu0 0.0
    %1613 = vmatpush1.msra.mxu0 0.0
    %1614 = vmatprep.subr.mxu0 0.0
    %1615 = vmatpush1.msra.mxu0 0.0
    %1616 = vmatprep.subr.mxu0 0.0
    %1617 = vmatpush1.msra.mxu0 0.0
    %1618 = vmatprep.subr.mxu0 0.0
    %1619 = vmatpush1.msra.mxu0 0.0
    %1620 = vmatprep.subr.mxu0 0.0
    %1621 = vmatpush1.msra.mxu0 0.0
    %1622 = vmatprep.subr.mxu0 0.0
    %1623 = vmatpush1.msra.mxu0 0.0
    %1624 = vmatprep.subr.mxu0 0.0
    %1625 = vmatpush1.msra.mxu0 0.0
    %1626 = vmatprep.subr.mxu0 0.0
    %1627 = vmatpush1.msra.mxu0 0.0
    %1628 = vmatprep.subr.mxu0 0.0
    %1629 = vmatpush1.msra.mxu0 0.0
    %1630 = vmatprep.subr.mxu0 0.0
    %1631 = vmatpush1.msra.mxu0 0.0
    %1632 = vmatprep.subr.mxu0 0.0
    %1633 = vmatpush1.msra.mxu0 0.0
    %1634 = vmatprep.subr.mxu0 0.0
    %1635 = vmatpush1.msra.mxu0 0.0
    %1636 = vmatprep.subr.mxu0 0.0
    %1637 = vmatpush1.msra.mxu0 0.0
    %1638 = vmatprep.subr.mxu0 0.0
    %1639 = vmatpush1.msra.mxu0 0.0
    %1640 = vmatprep.subr.mxu0 0.0
    %1641 = vmatpush1.msra.mxu0 0.0
    %1642 = vmatprep.subr.mxu0 0.0
    %1643 = vmatpush1.msra.mxu0 0.0
    %1644 = vmatprep.subr.mxu0 0.0
    %1645 = vmatpush1.msra.mxu0 0.0
    %1646 = vmatprep.subr.mxu0 0.0
    %1647 = vmatpush1.msra.mxu0 0.0
    %1648 = vmatprep.subr.mxu0 0.0
    %1649 = vmatpush1.msra.mxu0 0.0
    %1650 = vmatprep.subr.mxu0 0.0
    %1651 = vmatpush1.msra.mxu0 0.0
    %1652 = vmatprep.subr.mxu0 0.0
    %1653 = vmatpush1.msra.mxu0 0.0
    %1654 = vmatprep.subr.mxu0 0.0
    %1655 = vmatpush1.msra.mxu0 0.0
    %1656 = vmatprep.subr.mxu0 0.0
    %1657 = vmatpush1.msra.mxu0 0.0
    %1658 = vmatprep.subr.mxu0 0.0
    %1659 = vmatpush1.msra.mxu0 0.0
    %1660 = vmatprep.subr.mxu0 0.0
    %1661 = vmatpush1.msra.mxu0 0.0
    %1662 = vmatprep.subr.mxu0 0.0
    %1663 = vmatpush1.msra.mxu0 0.0
    %1664 = vmatprep.subr.mxu0 0.0
    %1665 = vmatpush1.msra.mxu0 0.0
    %1666 = vmatprep.subr.mxu0 0.0
    %1667 = vmatpush1.msra.mxu0 0.0
    %1668 = vmatprep.subr.mxu0 0.0
    %1669 = vmatpush1.msra.mxu0 0.0
    %1670 = vmatprep.subr.mxu0 0.0
    %1671 = vmatpush1.msra.mxu0 0.0
    %1672 = vmatprep.subr.mxu0 0.0
    %1673 = vmatpush1.msra.mxu0 0.0
    %1674 = vmatprep.mubr.f32.mxu0 0.0
    %1675 = vmatmul.mubr.f32.gmra.mrb[0].mxu0 %v1608
    %v1676 = vpop.f32.mrb[0].mxu0
    %v1677 = vadd.f32 0.0, %v1676
    %v1678 = vpop.f32.mrb[0].mxu0
    %1679 = vdwg.mxu0
    %v1681 = vsel %vm1606, %v853, 0
    %1683 = vmatprep.subr.mxu0 0.0
    %1684 = vmatpush1.msra.mxu0 %v1599
    %1685 = vmatprep.subr.mxu0 0.0
    %1686 = vmatpush1.msra.mxu0 0.0
    %1687 = vmatprep.subr.mxu0 0.0
    %1688 = vmatpush1.msra.mxu0 0.0
    %1689 = vmatprep.subr.mxu0 0.0
    %1690 = vmatpush1.msra.mxu0 0.0
    %1691 = vmatprep.subr.mxu0 0.0
    %1692 = vmatpush1.msra.mxu0 0.0
    %1693 = vmatprep.subr.mxu0 0.0
    %1694 = vmatpush1.msra.mxu0 0.0
    %1695 = vmatprep.subr.mxu0 0.0
    %1696 = vmatpush1.msra.mxu0 0.0
    %1697 = vmatprep.subr.mxu0 0.0
    %1698 = vmatpush1.msra.mxu0 0.0
    %1699 = vmatprep.subr.mxu0 0.0
    %1700 = vmatpush1.msra.mxu0 0.0
    %1701 = vmatprep.subr.mxu0 0.0
    %1702 = vmatpush1.msra.mxu0 0.0
    %1703 = vmatprep.subr.mxu0 0.0
    %1704 = vmatpush1.msra.mxu0 0.0
    %1705 = vmatprep.subr.mxu0 0.0
    %1706 = vmatpush1.msra.mxu0 0.0
    %1707 = vmatprep.subr.mxu0 0.0
    %1708 = vmatpush1.msra.mxu0 0.0
    %1709 = vmatprep.subr.mxu0 0.0
    %1710 = vmatpush1.msra.mxu0 0.0
    %1711 = vmatprep.subr.mxu0 0.0
    %1712 = vmatpush1.msra.mxu0 0.0
    %1713 = vmatprep.subr.mxu0 0.0
    %1714 = vmatpush1.msra.mxu0 0.0
    %1715 = vmatprep.subr.mxu0 0.0
    %1716 = vmatpush1.msra.mxu0 0.0
    %1717 = vmatprep.subr.mxu0 0.0
    %1718 = vmatpush1.msra.mxu0 0.0
    %1719 = vmatprep.subr.mxu0 0.0
    %1720 = vmatpush1.msra.mxu0 0.0
    %1721 = vmatprep.subr.mxu0 0.0
    %1722 = vmatpush1.msra.mxu0 0.0
    %1723 = vmatprep.subr.mxu0 0.0
    %1724 = vmatpush1.msra.mxu0 0.0
    %1725 = vmatprep.subr.mxu0 0.0
    %1726 = vmatpush1.msra.mxu0 0.0
    %1727 = vmatprep.subr.mxu0 0.0
    %1728 = vmatpush1.msra.mxu0 0.0
    %1729 = vmatprep.subr.mxu0 0.0
    %1730 = vmatpush1.msra.mxu0 0.0
    %1731 = vmatprep.subr.mxu0 0.0
    %1732 = vmatpush1.msra.mxu0 0.0
    %1733 = vmatprep.subr.mxu0 0.0
    %1734 = vmatpush1.msra.mxu0 0.0
    %1735 = vmatprep.subr.mxu0 0.0
    %1736 = vmatpush1.msra.mxu0 0.0
    %1737 = vmatprep.subr.mxu0 0.0
    %1738 = vmatpush1.msra.mxu0 0.0
    %1739 = vmatprep.subr.mxu0 0.0
    %1740 = vmatpush1.msra.mxu0 0.0
    %1741 = vmatprep.subr.mxu0 0.0
    %1742 = vmatpush1.msra.mxu0 0.0
    %1743 = vmatprep.subr.mxu0 0.0
    %1744 = vmatpush1.msra.mxu0 0.0
    %1745 = vmatprep.subr.mxu0 0.0
    %1746 = vmatpush1.msra.mxu0 0.0
    %1747 = vmatprep.mubr.f32.mxu0 0.0
    %1748 = vmatmul.mubr.f32.gmra.mrb[0].mxu0 %v1681
    %v1749 = vpop.f32.mrb[0].mxu0
    %v1750 = vadd.f32 0.0, %v1749
    %v1751 = vpop.f32.mrb[0].mxu0
    %1752 = vdwg.mxu0
    %v1754 = vsel %vm1606, %v855, 0
    %1756 = vmatprep.subr.mxu0 0.0
    %1757 = vmatpush1.msra.mxu0 %v1600
    %1758 = vmatprep.subr.mxu0 0.0
    %1759 = vmatpush1.msra.mxu0 0.0
    %1760 = vmatprep.subr.mxu0 0.0
    %1761 = vmatpush1.msra.mxu0 0.0
    %1762 = vmatprep.subr.mxu0 0.0
    %1763 = vmatpush1.msra.mxu0 0.0
    %1764 = vmatprep.subr.mxu0 0.0
    %1765 = vmatpush1.msra.mxu0 0.0
    %1766 = vmatprep.subr.mxu0 0.0
    %1767 = vmatpush1.msra.mxu0 0.0
    %1768 = vmatprep.subr.mxu0 0.0
    %1769 = vmatpush1.msra.mxu0 0.0
    %1770 = vmatprep.subr.mxu0 0.0
    %1771 = vmatpush1.msra.mxu0 0.0
    %1772 = vmatprep.subr.mxu0 0.0
    %1773 = vmatpush1.msra.mxu0 0.0
    %1774 = vmatprep.subr.mxu0 0.0
    %1775 = vmatpush1.msra.mxu0 0.0
    %1776 = vmatprep.subr.mxu0 0.0
    %1777 = vmatpush1.msra.mxu0 0.0
    %1778 = vmatprep.subr.mxu0 0.0
    %1779 = vmatpush1.msra.mxu0 0.0
    %1780 = vmatprep.subr.mxu0 0.0
    %1781 = vmatpush1.msra.mxu0 0.0
    %1782 = vmatprep.subr.mxu0 0.0
    %1783 = vmatpush1.msra.mxu0 0.0
    %1784 = vmatprep.subr.mxu0 0.0
    %1785 = vmatpush1.msra.mxu0 0.0
    %1786 = vmatprep.subr.mxu0 0.0
    %1787 = vmatpush1.msra.mxu0 0.0
    %1788 = vmatprep.subr.mxu0 0.0
    %1789 = vmatpush1.msra.mxu0 0.0
    %1790 = vmatprep.subr.mxu0 0.0
    %1791 = vmatpush1.msra.mxu0 0.0
    %1792 = vmatprep.subr.mxu0 0.0
    %1793 = vmatpush1.msra.mxu0 0.0
    %1794 = vmatprep.subr.mxu0 0.0
    %1795 = vmatpush1.msra.mxu0 0.0
    %1796 = vmatprep.subr.mxu0 0.0
    %1797 = vmatpush1.msra.mxu0 0.0
    %1798 = vmatprep.subr.mxu0 0.0
    %1799 = vmatpush1.msra.mxu0 0.0
    %1800 = vmatprep.subr.mxu0 0.0
    %1801 = vmatpush1.msra.mxu0 0.0
    %1802 = vmatprep.subr.mxu0 0.0
    %1803 = vmatpush1.msra.mxu0 0.0
    %1804 = vmatprep.subr.mxu0 0.0
    %1805 = vmatpush1.msra.mxu0 0.0
    %1806 = vmatprep.subr.mxu0 0.0
    %1807 = vmatpush1.msra.mxu0 0.0
    %1808 = vmatprep.subr.mxu0 0.0
    %1809 = vmatpush1.msra.mxu0 0.0
    %1810 = vmatprep.subr.mxu0 0.0
    %1811 = vmatpush1.msra.mxu0 0.0
    %1812 = vmatprep.subr.mxu0 0.0
    %1813 = vmatpush1.msra.mxu0 0.0
    %1814 = vmatprep.subr.mxu0 0.0
    %1815 = vmatpush1.msra.mxu0 0.0
    %1816 = vmatprep.subr.mxu0 0.0
    %1817 = vmatpush1.msra.mxu0 0.0
    %1818 = vmatprep.subr.mxu0 0.0
    %1819 = vmatpush1.msra.mxu0 0.0
    %1820 = vmatprep.mubr.f32.mxu0 0.0
    %1821 = vmatmul.mubr.f32.gmra.mrb[0].mxu0 %v1754
    %v1822 = vpop.f32.mrb[0].mxu0
    %v1823 = vadd.f32 0.0, %v1822
    %v1824 = vpop.f32.mrb[0].mxu0
    %1825 = vdwg.mxu0
    %v1827 = vsel %vm1606, %v857, 0
    %1829 = vmatprep.subr.mxu0 0.0
    %1830 = vmatpush1.msra.mxu0 %v1601
    %1831 = vmatprep.subr.mxu0 0.0
    %1832 = vmatpush1.msra.mxu0 0.0
    %1833 = vmatprep.subr.mxu0 0.0
    %1834 = vmatpush1.msra.mxu0 0.0
    %1835 = vmatprep.subr.mxu0 0.0
    %1836 = vmatpush1.msra.mxu0 0.0
    %1837 = vmatprep.subr.mxu0 0.0
    %1838 = vmatpush1.msra.mxu0 0.0
    %1839 = vmatprep.subr.mxu0 0.0
    %1840 = vmatpush1.msra.mxu0 0.0
    %1841 = vmatprep.subr.mxu0 0.0
    %1842 = vmatpush1.msra.mxu0 0.0
    %1843 = vmatprep.subr.mxu0 0.0
    %1844 = vmatpush1.msra.mxu0 0.0
    %1845 = vmatprep.subr.mxu0 0.0
    %1846 = vmatpush1.msra.mxu0 0.0
    %1847 = vmatprep.subr.mxu0 0.0
    %1848 = vmatpush1.msra.mxu0 0.0
    %1849 = vmatprep.subr.mxu0 0.0
    %1850 = vmatpush1.msra.mxu0 0.0
    %1851 = vmatprep.subr.mxu0 0.0
    %1852 = vmatpush1.msra.mxu0 0.0
    %1853 = vmatprep.subr.mxu0 0.0
    %1854 = vmatpush1.msra.mxu0 0.0
    %1855 = vmatprep.subr.mxu0 0.0
    %1856 = vmatpush1.msra.mxu0 0.0
    %1857 = vmatprep.subr.mxu0 0.0
    %1858 = vmatpush1.msra.mxu0 0.0
    %1859 = vmatprep.subr.mxu0 0.0
    %1860 = vmatpush1.msra.mxu0 0.0
    %1861 = vmatprep.subr.mxu0 0.0
    %1862 = vmatpush1.msra.mxu0 0.0
    %1863 = vmatprep.subr.mxu0 0.0
    %1864 = vmatpush1.msra.mxu0 0.0
    %1865 = vmatprep.subr.mxu0 0.0
    %1866 = vmatpush1.msra.mxu0 0.0
    %1867 = vmatprep.subr.mxu0 0.0
    %1868 = vmatpush1.msra.mxu0 0.0
    %1869 = vmatprep.subr.mxu0 0.0
    %1870 = vmatpush1.msra.mxu0 0.0
    %1871 = vmatprep.subr.mxu0 0.0
    %1872 = vmatpush1.msra.mxu0 0.0
    %1873 = vmatprep.subr.mxu0 0.0
    %1874 = vmatpush1.msra.mxu0 0.0
    %1875 = vmatprep.subr.mxu0 0.0
    %1876 = vmatpush1.msra.mxu0 0.0
    %1877 = vmatprep.subr.mxu0 0.0
    %1878 = vmatpush1.msra.mxu0 0.0
    %1879 = vmatprep.subr.mxu0 0.0
    %1880 = vmatpush1.msra.mxu0 0.0
    %1881 = vmatprep.subr.mxu0 0.0
    %1882 = vmatpush1.msra.mxu0 0.0
    %1883 = vmatprep.subr.mxu0 0.0
    %1884 = vmatpush1.msra.mxu0 0.0
    %1885 = vmatprep.subr.mxu0 0.0
    %1886 = vmatpush1.msra.mxu0 0.0
    %1887 = vmatprep.subr.mxu0 0.0
    %1888 = vmatpush1.msra.mxu0 0.0
    %1889 = vmatprep.subr.mxu0 0.0
    %1890 = vmatpush1.msra.mxu0 0.0
    %1891 = vmatprep.subr.mxu0 0.0
    %1892 = vmatpush1.msra.mxu0 0.0
    %1893 = vmatprep.mubr.f32.mxu0 0.0
    %1894 = vmatmul.mubr.f32.gmra.mrb[0].mxu0 %v1827
    %v1895 = vpop.f32.mrb[0].mxu0
    %v1896 = vadd.f32 0.0, %v1895
    %v1897 = vpop.f32.mrb[0].mxu0
    %1898 = vdwg.mxu0
    %v1900 = vsel %vm1606, %v859, 0
    %1902 = vmatprep.subr.mxu0 0.0
    %1903 = vmatpush1.msra.mxu0 %v1602
    %1904 = vmatprep.subr.mxu0 0.0
    %1905 = vmatpush1.msra.mxu0 0.0
    %1906 = vmatprep.subr.mxu0 0.0
    %1907 = vmatpush1.msra.mxu0 0.0
    %1908 = vmatprep.subr.mxu0 0.0
    %1909 = vmatpush1.msra.mxu0 0.0
    %1910 = vmatprep.subr.mxu0 0.0
    %1911 = vmatpush1.msra.mxu0 0.0
    %1912 = vmatprep.subr.mxu0 0.0
    %1913 = vmatpush1.msra.mxu0 0.0
    %1914 = vmatprep.subr.mxu0 0.0
    %1915 = vmatpush1.msra.mxu0 0.0
    %1916 = vmatprep.subr.mxu0 0.0
    %1917 = vmatpush1.msra.mxu0 0.0
    %1918 = vmatprep.subr.mxu0 0.0
    %1919 = vmatpush1.msra.mxu0 0.0
    %1920 = vmatprep.subr.mxu0 0.0
    %1921 = vmatpush1.msra.mxu0 0.0
    %1922 = vmatprep.subr.mxu0 0.0
    %1923 = vmatpush1.msra.mxu0 0.0
    %1924 = vmatprep.subr.mxu0 0.0
    %1925 = vmatpush1.msra.mxu0 0.0
    %1926 = vmatprep.subr.mxu0 0.0
    %1927 = vmatpush1.msra.mxu0 0.0
    %1928 = vmatprep.subr.mxu0 0.0
    %1929 = vmatpush1.msra.mxu0 0.0
    %1930 = vmatprep.subr.mxu0 0.0
    %1931 = vmatpush1.msra.mxu0 0.0
    %1932 = vmatprep.subr.mxu0 0.0
    %1933 = vmatpush1.msra.mxu0 0.0
    %1934 = vmatprep.subr.mxu0 0.0
    %1935 = vmatpush1.msra.mxu0 0.0
    %1936 = vmatprep.subr.mxu0 0.0
    %1937 = vmatpush1.msra.mxu0 0.0
    %1938 = vmatprep.subr.mxu0 0.0
    %1939 = vmatpush1.msra.mxu0 0.0
    %1940 = vmatprep.subr.mxu0 0.0
    %1941 = vmatpush1.msra.mxu0 0.0
    %1942 = vmatprep.subr.mxu0 0.0
    %1943 = vmatpush1.msra.mxu0 0.0
    %1944 = vmatprep.subr.mxu0 0.0
    %1945 = vmatpush1.msra.mxu0 0.0
    %1946 = vmatprep.subr.mxu0 0.0
    %1947 = vmatpush1.msra.mxu0 0.0
    %1948 = vmatprep.subr.mxu0 0.0
    %1949 = vmatpush1.msra.mxu0 0.0
    %1950 = vmatprep.subr.mxu0 0.0
    %1951 = vmatpush1.msra.mxu0 0.0
    %1952 = vmatprep.subr.mxu0 0.0
    %1953 = vmatpush1.msra.mxu0 0.0
    %1954 = vmatprep.subr.mxu0 0.0
    %1955 = vmatpush1.msra.mxu0 0.0
    %1956 = vmatprep.subr.mxu0 0.0
    %1957 = vmatpush1.msra.mxu0 0.0
    %1958 = vmatprep.subr.mxu0 0.0
    %1959 = vmatpush1.msra.mxu0 0.0
    %1960 = vmatprep.subr.mxu0 0.0
    %1961 = vmatpush1.msra.mxu0 0.0
    %1962 = vmatprep.subr.mxu0 0.0
    %1963 = vmatpush1.msra.mxu0 0.0
    %1964 = vmatprep.subr.mxu0 0.0
    %1965 = vmatpush1.msra.mxu0 0.0
    %1966 = vmatprep.mubr.f32.mxu0 0.0
    %1967 = vmatmul.mubr.f32.gmra.mrb[0].mxu0 %v1900
    %v1968 = vpop.f32.mrb[0].mxu0
    %v1969 = vadd.f32 0.0, %v1968
    %v1970 = vpop.f32.mrb[0].mxu0
    %1971 = vdwg.mxu0
    %v1973 = vsel %vm1606, %v861, 0
    %1975 = vmatprep.subr.mxu0 0.0
    %1976 = vmatpush1.msra.mxu0 %v1603
    %1977 = vmatprep.subr.mxu0 0.0
    %1978 = vmatpush1.msra.mxu0 0.0
    %1979 = vmatprep.subr.mxu0 0.0
    %1980 = vmatpush1.msra.mxu0 0.0
    %1981 = vmatprep.subr.mxu0 0.0
    %1982 = vmatpush1.msra.mxu0 0.0
    %1983 = vmatprep.subr.mxu0 0.0
    %1984 = vmatpush1.msra.mxu0 0.0
    %1985 = vmatprep.subr.mxu0 0.0
    %1986 = vmatpush1.msra.mxu0 0.0
    %1987 = vmatprep.subr.mxu0 0.0
    %1988 = vmatpush1.msra.mxu0 0.0
    %1989 = vmatprep.subr.mxu0 0.0
    %1990 = vmatpush1.msra.mxu0 0.0
    %1991 = vmatprep.subr.mxu0 0.0
    %1992 = vmatpush1.msra.mxu0 0.0
    %1993 = vmatprep.subr.mxu0 0.0
    %1994 = vmatpush1.msra.mxu0 0.0
    %1995 = vmatprep.subr.mxu0 0.0
    %1996 = vmatpush1.msra.mxu0 0.0
    %1997 = vmatprep.subr.mxu0 0.0
    %1998 = vmatpush1.msra.mxu0 0.0
    %1999 = vmatprep.subr.mxu0 0.0
    %2000 = vmatpush1.msra.mxu0 0.0
    %2001 = vmatprep.subr.mxu0 0.0
    %2002 = vmatpush1.msra.mxu0 0.0
    %2003 = vmatprep.subr.mxu0 0.0
    %2004 = vmatpush1.msra.mxu0 0.0
    %2005 = vmatprep.subr.mxu0 0.0
    %2006 = vmatpush1.msra.mxu0 0.0
    %2007 = vmatprep.subr.mxu0 0.0
    %2008 = vmatpush1.msra.mxu0 0.0
    %2009 = vmatprep.subr.mxu0 0.0
    %2010 = vmatpush1.msra.mxu0 0.0
    %2011 = vmatprep.subr.mxu0 0.0
    %2012 = vmatpush1.msra.mxu0 0.0
    %2013 = vmatprep.subr.mxu0 0.0
    %2014 = vmatpush1.msra.mxu0 0.0
    %2015 = vmatprep.subr.mxu0 0.0
    %2016 = vmatpush1.msra.mxu0 0.0
    %2017 = vmatprep.subr.mxu0 0.0
    %2018 = vmatpush1.msra.mxu0 0.0
    %2019 = vmatprep.subr.mxu0 0.0
    %2020 = vmatpush1.msra.mxu0 0.0
    %2021 = vmatprep.subr.mxu0 0.0
    %2022 = vmatpush1.msra.mxu0 0.0
    %2023 = vmatprep.subr.mxu0 0.0
    %2024 = vmatpush1.msra.mxu0 0.0
    %2025 = vmatprep.subr.mxu0 0.0
    %2026 = vmatpush1.msra.mxu0 0.0
    %2027 = vmatprep.subr.mxu0 0.0
    %2028 = vmatpush1.msra.mxu0 0.0
    %2029 = vmatprep.subr.mxu0 0.0
    %2030 = vmatpush1.msra.mxu0 0.0
    %2031 = vmatprep.subr.mxu0 0.0
    %2032 = vmatpush1.msra.mxu0 0.0
    %2033 = vmatprep.subr.mxu0 0.0
    %2034 = vmatpush1.msra.mxu0 0.0
    %2035 = vmatprep.subr.mxu0 0.0
    %2036 = vmatpush1.msra.mxu0 0.0
    %2037 = vmatprep.subr.mxu0 0.0
    %2038 = vmatpush1.msra.mxu0 0.0
    %2039 = vmatprep.mubr.f32.mxu0 0.0
    %2040 = vmatmul.mubr.f32.gmra.mrb[0].mxu0 %v1973
    %v2041 = vpop.f32.mrb[0].mxu0
    %v2042 = vadd.f32 0.0, %v2041
    %v2043 = vpop.f32.mrb[0].mxu0
    %2044 = vdwg.mxu0
    %v2046 = vsel %vm1606, %v863, 0
    %2048 = vmatprep.subr.mxu0 0.0
    %2049 = vmatpush1.msra.mxu0 %v1604
    %2050 = vmatprep.subr.mxu0 0.0
    %2051 = vmatpush1.msra.mxu0 0.0
    %2052 = vmatprep.subr.mxu0 0.0
    %2053 = vmatpush1.msra.mxu0 0.0
    %2054 = vmatprep.subr.mxu0 0.0
    %2055 = vmatpush1.msra.mxu0 0.0
    %2056 = vmatprep.subr.mxu0 0.0
    %2057 = vmatpush1.msra.mxu0 0.0
    %2058 = vmatprep.subr.mxu0 0.0
    %2059 = vmatpush1.msra.mxu0 0.0
    %2060 = vmatprep.subr.mxu0 0.0
    %2061 = vmatpush1.msra.mxu0 0.0
    %2062 = vmatprep.subr.mxu0 0.0
    %2063 = vmatpush1.msra.mxu0 0.0
    %2064 = vmatprep.subr.mxu0 0.0
    %2065 = vmatpush1.msra.mxu0 0.0
    %2066 = vmatprep.subr.mxu0 0.0
    %2067 = vmatpush1.msra.mxu0 0.0
    %2068 = vmatprep.subr.mxu0 0.0
    %2069 = vmatpush1.msra.mxu0 0.0
    %2070 = vmatprep.subr.mxu0 0.0
    %2071 = vmatpush1.msra.mxu0 0.0
    %2072 = vmatprep.subr.mxu0 0.0
    %2073 = vmatpush1.msra.mxu0 0.0
    %2074 = vmatprep.subr.mxu0 0.0
    %2075 = vmatpush1.msra.mxu0 0.0
    %2076 = vmatprep.subr.mxu0 0.0
    %2077 = vmatpush1.msra.mxu0 0.0
    %2078 = vmatprep.subr.mxu0 0.0
    %2079 = vmatpush1.msra.mxu0 0.0
    %2080 = vmatprep.subr.mxu0 0.0
    %2081 = vmatpush1.msra.mxu0 0.0
    %2082 = vmatprep.subr.mxu0 0.0
    %2083 = vmatpush1.msra.mxu0 0.0
    %2084 = vmatprep.subr.mxu0 0.0
    %2085 = vmatpush1.msra.mxu0 0.0
    %2086 = vmatprep.subr.mxu0 0.0
    %2087 = vmatpush1.msra.mxu0 0.0
    %2088 = vmatprep.subr.mxu0 0.0
    %2089 = vmatpush1.msra.mxu0 0.0
    %2090 = vmatprep.subr.mxu0 0.0
    %2091 = vmatpush1.msra.mxu0 0.0
    %2092 = vmatprep.subr.mxu0 0.0
    %2093 = vmatpush1.msra.mxu0 0.0
    %2094 = vmatprep.subr.mxu0 0.0
    %2095 = vmatpush1.msra.mxu0 0.0
    %2096 = vmatprep.subr.mxu0 0.0
    %2097 = vmatpush1.msra.mxu0 0.0
    %2098 = vmatprep.subr.mxu0 0.0
    %2099 = vmatpush1.msra.mxu0 0.0
    %2100 = vmatprep.subr.mxu0 0.0
    %2101 = vmatpush1.msra.mxu0 0.0
    %2102 = vmatprep.subr.mxu0 0.0
    %2103 = vmatpush1.msra.mxu0 0.0
    %2104 = vmatprep.subr.mxu0 0.0
    %2105 = vmatpush1.msra.mxu0 0.0
    %2106 = vmatprep.subr.mxu0 0.0
    %2107 = vmatpush1.msra.mxu0 0.0
    %2108 = vmatprep.subr.mxu0 0.0
    %2109 = vmatpush1.msra.mxu0 0.0
    %2110 = vmatprep.subr.mxu0 0.0
    %2111 = vmatpush1.msra.mxu0 0.0
    %2112 = vmatprep.mubr.f32.mxu0 0.0
    %2113 = vmatmul.mubr.f32.gmra.mrb[0].mxu0 %v2046
    %v2114 = vpop.f32.mrb[0].mxu0
    %v2115 = vadd.f32 0.0, %v2114
    %v2116 = vpop.f32.mrb[0].mxu0
    %2117 = vdwg.mxu0
    %v2119 = vsel %vm1606, %v865, 0
    %2121 = vmatprep.subr.mxu0 0.0
    %2122 = vmatpush1.msra.mxu0 %v1605
    %2123 = vmatprep.subr.mxu0 0.0
    %2124 = vmatpush1.msra.mxu0 0.0
    %2125 = vmatprep.subr.mxu0 0.0
    %2126 = vmatpush1.msra.mxu0 0.0
    %2127 = vmatprep.subr.mxu0 0.0
    %2128 = vmatpush1.msra.mxu0 0.0
    %2129 = vmatprep.subr.mxu0 0.0
    %2130 = vmatpush1.msra.mxu0 0.0
    %2131 = vmatprep.subr.mxu0 0.0
    %2132 = vmatpush1.msra.mxu0 0.0
    %2133 = vmatprep.subr.mxu0 0.0
    %2134 = vmatpush1.msra.mxu0 0.0
    %2135 = vmatprep.subr.mxu0 0.0
    %2136 = vmatpush1.msra.mxu0 0.0
    %2137 = vmatprep.subr.mxu0 0.0
    %2138 = vmatpush1.msra.mxu0 0.0
    %2139 = vmatprep.subr.mxu0 0.0
    %2140 = vmatpush1.msra.mxu0 0.0
    %2141 = vmatprep.subr.mxu0 0.0
    %2142 = vmatpush1.msra.mxu0 0.0
    %2143 = vmatprep.subr.mxu0 0.0
    %2144 = vmatpush1.msra.mxu0 0.0
    %2145 = vmatprep.subr.mxu0 0.0
    %2146 = vmatpush1.msra.mxu0 0.0
    %2147 = vmatprep.subr.mxu0 0.0
    %2148 = vmatpush1.msra.mxu0 0.0
    %2149 = vmatprep.subr.mxu0 0.0
    %2150 = vmatpush1.msra.mxu0 0.0
    %2151 = vmatprep.subr.mxu0 0.0
    %2152 = vmatpush1.msra.mxu0 0.0
    %2153 = vmatprep.subr.mxu0 0.0
    %2154 = vmatpush1.msra.mxu0 0.0
    %2155 = vmatprep.subr.mxu0 0.0
    %2156 = vmatpush1.msra.mxu0 0.0
    %2157 = vmatprep.subr.mxu0 0.0
    %2158 = vmatpush1.msra.mxu0 0.0
    %2159 = vmatprep.subr.mxu0 0.0
    %2160 = vmatpush1.msra.mxu0 0.0
    %2161 = vmatprep.subr.mxu0 0.0
    %2162 = vmatpush1.msra.mxu0 0.0
    %2163 = vmatprep.subr.mxu0 0.0
    %2164 = vmatpush1.msra.mxu0 0.0
    %2165 = vmatprep.subr.mxu0 0.0
    %2166 = vmatpush1.msra.mxu0 0.0
    %2167 = vmatprep.subr.mxu0 0.0
    %2168 = vmatpush1.msra.mxu0 0.0
    %2169 = vmatprep.subr.mxu0 0.0
    %2170 = vmatpush1.msra.mxu0 0.0
    %2171 = vmatprep.subr.mxu0 0.0
    %2172 = vmatpush1.msra.mxu0 0.0
    %2173 = vmatprep.subr.mxu0 0.0
    %2174 = vmatpush1.msra.mxu0 0.0
    %2175 = vmatprep.subr.mxu0 0.0
    %2176 = vmatpush1.msra.mxu0 0.0
    %2177 = vmatprep.subr.mxu0 0.0
    %2178 = vmatpush1.msra.mxu0 0.0
    %2179 = vmatprep.subr.mxu0 0.0
    %2180 = vmatpush1.msra.mxu0 0.0
    %2181 = vmatprep.subr.mxu0 0.0
    %2182 = vmatpush1.msra.mxu0 0.0
    %2183 = vmatprep.subr.mxu0 0.0
    %2184 = vmatpush1.msra.mxu0 0.0
    %2185 = vmatprep.mubr.f32.mxu0 0.0
    %2186 = vmatmul.mubr.f32.gmra.mrb[0].mxu0 %v2119
    %v2187 = vpop.f32.mrb[0].mxu0
    %v2188 = vadd.f32 0.0, %v2187
    %v2189 = vpop.f32.mrb[0].mxu0
    %2190 = vdwg.mxu0
    %v2191 = vsub.f32 %v79, %v1677
    %v2192 = vsub.f32 %v80, %v1750
    %v2193 = vsub.f32 %v81, %v1823
    %v2194 = vsub.f32 %v82, %v1896
    %v2195 = vsub.f32 %v83, %v1969
    %v2196 = vsub.f32 %v84, %v2042
    %v2197 = vsub.f32 %v85, %v2115
    %v2198 = vsub.f32 %v86, %v2188
    %2199 = vst.msk [vmem:[#allocation10] sm:$0x1] %vm128, %v2191
    %2200 = vst.msk [vmem:[#allocation10 + $0x1] sm:$0x1] %vm128, %v2192
    %2201 = vst.msk [vmem:[#allocation10 + $0x2] sm:$0x1] %vm128, %v2193
    %2202 = vst.msk [vmem:[#allocation10 + $0x3] sm:$0x1] %vm128, %v2194
    %2203 = vst.msk [vmem:[#allocation10 + $0x4] sm:$0x1] %vm128, %v2195
    %2204 = vst.msk [vmem:[#allocation10 + $0x5] sm:$0x1] %vm128, %v2196
    %2205 = vst.msk [vmem:[#allocation10 + $0x6] sm:$0x1] %vm128, %v2197
    %2206 = vst.msk [vmem:[#allocation10 + $0x7] sm:$0x1] %vm128, %v2198
    // Predicated region
    $region50: #{tpu_custom_call.1} parent=1 // pred_check
      _
    $region51: #{tpu_custom_call.1} parent=1 // pred_check_branch
      %2208 = sbr.rel (0) target = $region53
    $region52: #{tpu_custom_call.1} parent=1 // pred_region
      %s2210 = ssub.s32 128, 128
      %2211 = vsyncadd [#allocation5], %s2210
      %s2212 = sshll.u32 [#allocation9], 4
      %s2213 = int_to_ptr.vmem [resolvable:$true] %s2212
      %2218 = dma.vmem_to_hbm [thread:$0]  %s2213, 128, %s9, [#allocation5], 16, 16, 1
    $region53: #{tpu_custom_call.1} parent=1 // pred_fallthru
      _
    // Predicated region
    $region54: #{tpu_custom_call.1} parent=1 // pred_check
      _
    $region55: #{tpu_custom_call.1} parent=1 // pred_check_branch
      %2220 = sbr.rel (0) target = $region57
    $region56: #{tpu_custom_call.1} parent=1 // pred_region
      %s2222 = ssub.s32 128, 128
      %2223 = vsyncadd [#allocation11], %s2222
      %s2224 = sshll.u32 [#allocation10], 4
      %s2225 = int_to_ptr.vmem [resolvable:$true] %s2224
      %2230 = dma.vmem_to_hbm [thread:$0]  %s2225, 128, %s10, [#allocation11], 16, 16, 1
    $region57: #{tpu_custom_call.1} parent=1 // pred_fallthru
      _
    // Predicated region
    $region58: #{tpu_custom_call.1} parent=1 // pred_check
      _
    $region59: #{tpu_custom_call.1} parent=1 // pred_check_branch
      %2232 = sbr.rel (0) target = $region61
    $region60: #{tpu_custom_call.1} parent=1 // pred_region
      %2233 = dma.done [#allocation5], 128
    $region61: #{tpu_custom_call.1} parent=1 // pred_fallthru
      _
    // Predicated region
    $region62: #{tpu_custom_call.1} parent=1 // pred_check
      _
    $region63: #{tpu_custom_call.1} parent=1 // pred_check_branch
      %2235 = sbr.rel (0) target = $region65
    $region64: #{tpu_custom_call.1} parent=1 // pred_region
      %2236 = dma.done [#allocation11], 128
    $region65: #{tpu_custom_call.1} parent=1 // pred_fallthru
      _
    %2237 = vsyncpa [#allocation4], 1
    %2238 = vsyncpa [#allocation7], 1
    %2239 = vsyncpa [#allocation5], 1
    %2240 = vsyncpa [#allocation11], 1

</llo_original>
